<compile_context>
chip_gen: v7x
topology: tpu7x:2x2x1
jax: 0.10.0
libtpu: 0.0.40
codegen_flags: <defaults>
</compile_context>

<pallas_src>
import functools
import math

import numpy as np
import jax
import jax.numpy as jnp
from jax.experimental import pallas as pl
from jax.experimental.pallas import tpu as pltpu


def _round_up(x, m):
    return ((x + m - 1) // m) * m


def _compiler_params(dims):
    # tiles are sized well under v7x's 64 MiB physical VMEM; 32 MiB scoped limit
    # is safe on v5e / v6e / v7x.
    return pltpu.CompilerParams(
        dimension_semantics=dims,
        vmem_limit_bytes=32 * 1024 * 1024,
    )


# ----------------------------------------------------------------------------
# Pallas kernels
# ----------------------------------------------------------------------------
def _mm_kernel(*refs, use_prelu, use_res):
    """Tiled matmul with fused (scale, shift[, +residual][, PReLU]) epilogue."""
    x_ref, w_ref, s_ref, t_ref = refs[:4]
    pos = 4
    a_ref = None
    r_ref = None
    if use_prelu:
        a_ref = refs[pos]
        pos += 1
    if use_res:
        r_ref = refs[pos]
        pos += 1
    o_ref, acc_ref = refs[pos], refs[pos + 1]

    @pl.when(pl.program_id(2) == 0)
    def _init():
        acc_ref[...] = jnp.zeros_like(acc_ref)

    # bf16 x bf16 MXU operands, f32 accumulation.
    acc_ref[...] += jnp.dot(x_ref[...], w_ref[...],
                            preferred_element_type=jnp.float32)

    @pl.when(pl.program_id(2) == pl.num_programs(2) - 1)
    def _finalize():
        v = acc_ref[...] * s_ref[...] + t_ref[...]
        if use_res:
            v = v + r_ref[...].astype(jnp.float32)
        if use_prelu:
            v = jnp.where(v >= 0.0, v, a_ref[...] * v)
        o_ref[...] = v.astype(o_ref.dtype)


def _dw3x3_kernel(x_ref, w_ref, b_ref, o_ref, *, taps, Ho, Wo):
    # x_ref: (1, G, Hq, Wq, Cb) bf16 parity planes; w_ref: (9, Cb) f32; b_ref: (1, Cb)
    w = w_ref[...]
    # load each unique column-shifted slab once (3 for stride-1, 6 for stride-2)
    cols = {}
    for (g, r, c) in taps:
        if (g, c) not in cols:
            cols[(g, c)] = x_ref[0, g, :, c:c + Wo, :]          # (Hq, Wo, Cb)
    acc = jnp.zeros((Ho, Wo, w.shape[-1]), jnp.float32)
    for k, (g, r, c) in enumerate(taps):
        acc = acc + cols[(g, c)][r:r + Ho].astype(jnp.float32) * w[k]
    o_ref[0] = (acc + b_ref[0]).astype(o_ref.dtype)


def _maxpool3_kernel(x_ref, o_ref, *, taps, Ho, Wo):
    cols = {}
    for (g, r, c) in taps:
        if (g, c) not in cols:
            cols[(g, c)] = x_ref[0, g, :, c:c + Wo, :]
    m = None
    for (g, r, c) in taps:
        t = cols[(g, c)][r:r + Ho]
        m = t if m is None else jnp.maximum(m, t)
    o_ref[0] = m


# ----------------------------------------------------------------------------
# Pallas wrappers
# ----------------------------------------------------------------------------
@functools.partial(jax.jit, static_argnames=("n_true", "out_dtype"))
def pallas_matmul_fused(x, w_p, scale_p, shift_p, alpha=None, residual=None, *,
                        n_true, out_dtype=jnp.bfloat16):
    """out = prelu_or_id((x @ w) * scale + shift [+ residual]).

    x: (M, K) f32/bf16 (cast to bf16 here), w_p: (Kp, Np) bf16 pre-padded,
    scale/shift/alpha: (1, Np) f32 pre-padded, residual: (M, N) bf16.
    """
    M, K = x.shape
    Kp, Np = w_p.shape
    N = n_true

    def _pick(total, cands):
        for c in cands:
            if total % c == 0:
                return c
        return total

    tk = _pick(Kp, (2048, 1024, 512, 256, 128))              # single K step here
    tn = _pick(Np, (512, 256, 128)) if Np >= 1024 else _pick(Np, (256, 128))
    tm = min(512, _round_up(M, 16))                           # bf16-friendly sublanes
    Mp = _round_up(M, tm)
    # keep >=2 parallel grid blocks when possible so both v7x TensorCores work
    if (Mp // tm) * (Np // tn) < 2 and M > 16:
        tm = _round_up((M + 1) // 2, 16)
        Mp = _round_up(M, tm)

    xb = x.astype(jnp.bfloat16)
    if (Mp, Kp) != (M, K):
        xb = jnp.pad(xb, ((0, Mp - M), (0, Kp - K)))

    use_prelu = alpha is not None
    use_res = residual is not None

    operands = [xb, w_p, scale_p, shift_p]
    vec_spec = pl.BlockSpec((1, tn), lambda i, j, k: (0, j))
    in_specs = [
        pl.BlockSpec((tm, tk), lambda i, j, k: (i, k)),
        pl.BlockSpec((tk, tn), lambda i, j, k: (k, j)),
        vec_spec, vec_spec,
    ]
    if use_prelu:
        operands.append(alpha)
        in_specs.append(vec_spec)
    if use_res:
        r = residual.astype(jnp.bfloat16)
        if r.shape != (Mp, Np):
            r = jnp.pad(r, ((0, Mp - r.shape[0]), (0, Np - r.shape[1])))
        operands.append(r)
        in_specs.append(pl.BlockSpec((tm, tn), lambda i, j, k: (i, j)))

    out = pl.pallas_call(
        functools.partial(_mm_kernel, use_prelu=use_prelu, use_res=use_res),
        grid=(Mp // tm, Np // tn, Kp // tk),
        in_specs=in_specs,
        out_specs=pl.BlockSpec((tm, tn), lambda i, j, k: (i, j)),
        out_shape=jax.ShapeDtypeStruct((Mp, Np), out_dtype),
        scratch_shapes=[pltpu.VMEM((tm, tn), jnp.float32)],
        compiler_params=_compiler_params(("parallel", "parallel", "arbitrary")),
    )(*operands)
    if (Mp, Np) != (M, N):
        out = out[:M, :N]
    return out


_STRIDE2_TAPS = tuple(((i % 2) * 2 + (j % 2), i // 2, j // 2)
                      for i in range(3) for j in range(3))


def _parity_planes(xp, pad_value=0.0):
    """Split a padded NHWC tensor into 4 parity planes for stride-2 kernels."""
    if xp.shape[1] % 2:
        xp = jnp.pad(xp, ((0, 0), (0, 1), (0, 0), (0, 0)), constant_values=pad_value)
    if xp.shape[2] % 2:
        xp = jnp.pad(xp, ((0, 0), (0, 0), (0, 1), (0, 0)), constant_values=pad_value)
    return jnp.stack([xp[:, a::2, b::2, :] for a in range(2) for b in range(2)],
                     axis=1)


@functools.partial(jax.jit, static_argnames=("stride", "dilation"))
def pallas_depthwise3x3(x, w9, b, *, stride, dilation):
    """Depthwise 3x3 conv with fixed_padding semantics; strided output computed
    directly in-kernel.  x: NHWC bf16, w9: (9, C) f32, b: (C,) f32."""
    N, H, W, C = x.shape
    keff = 3 + 2 * (dilation - 1)
    pad_total = keff - 1
    pb, pe = pad_total // 2, pad_total - pad_total // 2
    Ho = (H + pad_total - keff) // stride + 1
    Wo = (W + pad_total - keff) // stride + 1
    xp = jnp.pad(x, ((0, 0), (pb, pe), (pb, pe), (0, 0)))

    if stride == 1:
        planes = xp[:, None]
        taps = tuple((0, i * dilation, j * dilation)
                     for i in range(3) for j in range(3))
    else:
        assert stride == 2 and dilation == 1
        # TODO(synk): do the stride-2 parity selection in-kernel (strided pl.ds /
        # index_map) instead of materializing parity planes in HBM.
        planes = _parity_planes(xp)
        taps = _STRIDE2_TAPS

    G, Hq, Wq = planes.shape[1], planes.shape[2], planes.shape[3]
    Cb = C if C <= 256 else 256
    grid = (N, C // Cb)

    # TODO(synk): tile H (with halo rows) for very large spatial slabs on v7x.
    return pl.pallas_call(
        functools.partial(_dw3x3_kernel, taps=taps, Ho=Ho, Wo=Wo),
        grid=grid,
        in_specs=[
            pl.BlockSpec((1, G, Hq, Wq, Cb), lambda n, c: (n, 0, 0, 0, c)),
            pl.BlockSpec((9, Cb), lambda n, c: (0, c)),
            pl.BlockSpec((1, Cb), lambda n, c: (0, c)),
        ],
        out_specs=pl.BlockSpec((1, Ho, Wo, Cb), lambda n, c: (n, 0, 0, c)),
        out_shape=jax.ShapeDtypeStruct((N, Ho, Wo, C), jnp.bfloat16),
        compiler_params=_compiler_params(("parallel", "parallel")),
    )(planes, w9, b.reshape(1, C))


@jax.jit
def pallas_maxpool3_s2_p1(x):
    """MaxPool2d(kernel=3, stride=2, padding=1) on NHWC bf16, strided output in-kernel."""
    N, H, W, C = x.shape
    Ho = (H + 2 - 3) // 2 + 1
    Wo = (W + 2 - 3) // 2 + 1
    neg = float(jnp.finfo(jnp.bfloat16).min)
    xp = jnp.pad(x, ((0, 0), (1, 1), (1, 1), (0, 0)), constant_values=neg)
    planes = _parity_planes(xp, pad_value=neg)
    G, Hq, Wq = planes.shape[1], planes.shape[2], planes.shape[3]
    return pl.pallas_call(
        functools.partial(_maxpool3_kernel, taps=_STRIDE2_TAPS, Ho=Ho, Wo=Wo),
        grid=(N,),
        in_specs=[pl.BlockSpec((1, G, Hq, Wq, C), lambda n: (n, 0, 0, 0, 0))],
        out_specs=pl.BlockSpec((1, Ho, Wo, C), lambda n: (n, 0, 0, 0)),
        out_shape=jax.ShapeDtypeStruct((N, Ho, Wo, C), jnp.bfloat16),
        compiler_params=_compiler_params(("parallel",)),
    )(planes)


# ----------------------------------------------------------------------------
# layer wrappers (thin JAX glue around the kernels)
# ----------------------------------------------------------------------------
def conv1x1_fused(x, p, stride=1, residual=None, out_dtype=jnp.bfloat16):
    """Pointwise conv with folded depthwise/bias/BN(+residual)(+PReLU) epilogue."""
    if stride != 1:
        # TODO(synk): fold the stride into the matmul M-axis index_map instead
        # of this XLA strided slice.
        x = x[:, ::stride, ::stride, :]
    N, H, W, C = x.shape
    res2d = None if residual is None else residual.reshape(N * H * W, -1)
    y = pallas_matmul_fused(x.reshape(N * H * W, C), p["w"], p["scale"], p["shift"],
                            alpha=p.get("alpha"), residual=res2d,
                            n_true=p["n"], out_dtype=out_dtype)
    return y.reshape(N, H, W, -1)


def conv_bn_relu_fwd(x, p):
    if p["k"] == 3:
        x = pallas_depthwise3x3(x, p["dw_w"], p["dw_b"], stride=1, dilation=1)
    return conv1x1_fused(x, p["pw"])


def bottleneck_fwd(x, p):
    out = conv1x1_fused(x, p["pw1"])                               # conv1+bn1+prelu1
    out = pallas_depthwise3x3(out, p["dw2_w"], p["dw2_b"],
                              stride=p["stride"], dilation=p["dilation"])
    out = conv1x1_fused(out, p["pw2"])                             # conv2 pw+bn2+prelu2
    if p["ds"] is not None:
        residual = conv1x1_fused(x, p["ds"], stride=p["stride"])   # downsample (+bn)
    else:
        residual = x
    # conv3 + bn3 + residual add + prelu3 fused into a single matmul epilogue
    return conv1x1_fused(out, p["pw3"], residual=residual)


def stem_fwd(x, p):
    """Conv2d(3,64,7,stride=2,pad=3,bias=False)+BN+PReLU via im2col + fused matmul."""
    N, H, W, C = x.shape
    xp = jnp.pad(x, ((0, 0), (3, 3), (3, 3), (0, 0)))
    Ho = (H + 6 - 7) // 2 + 1
    Wo = (W + 6 - 7) // 2 + 1
    # TODO(synk): drive the 7x7 taps through the matmul K grid axis instead of
    # materializing the (bf16) im2col matrix in HBM.
    patches = [xp[:, i:i + 2 * (Ho - 1) + 1:2, j:j + 2 * (Wo - 1) + 1:2, :]
               for i in range(7) for j in range(7)]
    pat = jnp.concatenate(patches, axis=-1).reshape(N * Ho * Wo, 49 * C)
    y = pallas_matmul_fused(pat, p["w"], p["scale"], p["shift"], alpha=p["alpha"],
                            n_true=p["n"])
    return y.reshape(N, Ho, Wo, -1)


@functools.lru_cache(maxsize=None)
def _interp_matrix(i, o):
    """Column-stochastic bilinear (align_corners=True) interpolation matrix (i, o)."""
    A = np.zeros((i, o), np.float32)
    if o == 1 or i == 1:
        A[0, :] = 1.0
        return jnp.asarray(A)
    pos = np.arange(o, dtype=np.float64) * (i - 1) / (o - 1)
    lo = np.floor(pos).astype(np.int64)
    hi = np.minimum(lo + 1, i - 1)
    wt = (pos - lo).astype(np.float32)
    cols = np.arange(o)
    A[lo, cols] += 1.0 - wt
    A[hi, cols] += wt
    return jnp.asarray(A)


def interp_bilinear_ac(x, oh, ow):
    """F.interpolate(mode='bilinear', align_corners=True) via separable matrix
    contractions (no gathers)."""
    N, H, W, C = x.shape
    if (oh, ow) == (H, W):
        return x
    Ah = _interp_matrix(H, oh)       # (H, oh)
    Aw = _interp_matrix(W, ow)       # (W, ow)
    y = jnp.einsum("nhwc,ho->nowc", x.astype(jnp.float32), Ah)
    y = jnp.einsum("nowc,wp->nopc", y, Aw)
    return y.astype(x.dtype)


# ----------------------------------------------------------------------------
# deterministic parameter init (synthetic weights; BN / biases folded up front,
# weights pre-padded & pre-cast to tiled lane-dense shapes)
# ----------------------------------------------------------------------------
class KeyGen:
    def __init__(self, seed):
        self.key = jax.random.PRNGKey(seed)

    def __call__(self):
        self.key, k = jax.random.split(self.key)
        return k


def _bn_affine(C, eps=1e-5):
    # inference-mode BN: gamma=1, beta=0, mean=0, var=1
    return (jnp.full((C,), 1.0 / math.sqrt(1.0 + eps), jnp.float32),
            jnp.zeros((C,), jnp.float32))


def init_pw_fused(kg, cin, cout, dw=False, bn=True, prelu=True):
    """1x1 conv (optionally a folded 1x1-depthwise * pointwise) with its bias and
    the following BN folded into (w, scale, shift); optional PReLU alpha.
    All tensors pre-padded to lane-dense tiled shapes, weights pre-cast bf16."""
    pw_w = jax.random.normal(kg(), (cin, cout), jnp.float32) / math.sqrt(cin)
    pw_b = jnp.zeros((cout,), jnp.float32)
    if dw:
        dw_w = jax.random.normal(kg(), (cin,), jnp.float32)
        dw_b = jnp.zeros((cin,), jnp.float32)
        w = dw_w[:, None] * pw_w
        b = dw_b @ pw_w + pw_b
    else:
        w = pw_w
        b = pw_b
    if bn:
        s, t = _bn_affine(cout)
        scale, shift = s, b * s + t
    else:
        scale, shift = jnp.ones((cout,), jnp.float32), b

    Kp, Np = _round_up(cin, 128), _round_up(cout, 128)
    w_p = jnp.pad(w, ((0, Kp - cin), (0, Np - cout))).astype(jnp.bfloat16)

    def _vec(v):
        return jnp.pad(v.reshape(1, cout), ((0, 0), (0, Np - cout)))

    p = {"w": w_p, "scale": _vec(scale), "shift": _vec(shift),
         "cin": cin, "n": cout}
    if prelu:
        p["alpha"] = _vec(jnp.full((cout,), 0.25, jnp.float32))
    return p


def init_dw3(kg, C):
    w = (jax.random.normal(kg(), (3, 3, C), jnp.float32) / 3.0).reshape(9, C)
    return w, jnp.zeros((C,), jnp.float32)


def init_bottleneck(kg, inplanes, planes, stride, dilation, downsample):
    p = {"stride": stride, "dilation": dilation}
    p["pw1"] = init_pw_fused(kg, inplanes, planes, dw=True)               # conv1+bn1+prelu1
    p["dw2_w"], p["dw2_b"] = init_dw3(kg, planes)                         # conv2 depthwise
    p["pw2"] = init_pw_fused(kg, planes, planes)                          # conv2 pw+bn2+prelu2
    # conv3+bn3; its alpha is relu3, applied AFTER the fused residual add
    p["pw3"] = init_pw_fused(kg, planes, planes * 4, dw=True, prelu=True)
    p["ds"] = (init_pw_fused(kg, inplanes, planes * 4, dw=True, prelu=False)
               if downsample else None)
    return p


def init_layer(kg, inplanes, planes, blocks, stride, dilation):
    params = []
    need_ds = (stride != 1) or (inplanes != planes * 4)
    params.append(init_bottleneck(kg, inplanes, planes, stride, dilation, need_ds))
    inplanes = planes * 4
    for _ in range(1, blocks):
        params.append(init_bottleneck(kg, inplanes, planes, 1, 1, False))
    return params, inplanes


def init_stem(kg):
    w = jax.random.normal(kg(), (7, 7, 3, 64), jnp.float32) / math.sqrt(147)
    s, t = _bn_affine(64)
    Kp, Np = _round_up(147, 128), _round_up(64, 128)
    w_p = jnp.pad(w.reshape(147, 64), ((0, Kp - 147), (0, Np - 64))).astype(jnp.bfloat16)

    def _vec(v):
        return jnp.pad(v.reshape(1, 64), ((0, 0), (0, Np - 64)))

    return {"w": w_p, "scale": _vec(s), "shift": _vec(t),
            "alpha": _vec(jnp.full((64,), 0.25, jnp.float32)),
            "cin": 147, "n": 64}


def init_cbr(kg, cin, cout, k):
    p = {"k": k}
    if k == 3:
        p["dw_w"], p["dw_b"] = init_dw3(kg, cin)
    p["pw"] = init_pw_fused(kg, cin, cout)
    return p


def init_msc(seed, num_classes):
    kg = KeyGen(seed)
    enc = {"stem": init_stem(kg)}
    strides, dilations = [1, 2, 2, 1], [1, 1, 1, 2]       # output_stride = 16
    layers, planes = [3, 4, 23, 3], [64, 128, 256, 512]
    inplanes = 64
    for li in range(4):
        enc[f"layer{li + 1}"], inplanes = init_layer(
            kg, inplanes, planes[li], layers[li], strides[li], dilations[li])
    return {
        "encoder": enc,
        "fg1": init_cbr(kg, 2048, 128, 3),
        "fg2": init_cbr(kg, 128, 2, 3),
        "cls1": init_pw_fused(kg, 2048, 512, bn=False, prelu=False),
        "cls2": init_pw_fused(kg, 512, num_classes, bn=False, prelu=False),
        "red1": init_cbr(kg, 2048, 1024, 1),
        "sem1": init_cbr(kg, 2048, 256, 3),
        "red2": init_cbr(kg, 512, 256, 1),
        "sem2": init_cbr(kg, 512, 32, 3),
        "red3": init_cbr(kg, 256, 32, 1),
        "sem3": init_cbr(kg, 64, num_classes, 1),
    }


# ----------------------------------------------------------------------------
# forward
# ----------------------------------------------------------------------------
def resnet_fwd(x, enc):
    x = stem_fwd(x, enc["stem"])
    x = pallas_maxpool3_s2_p1(x)

    def run(h, layer):
        for bp in layer:
            h = bottleneck_fwd(h, bp)
        return h

    c1 = run(x, enc["layer1"])
    c2 = run(c1, enc["layer2"])
    c3 = run(c2, enc["layer3"])
    c4 = run(c3, enc["layer4"])
    return c1, c2, c3, c4


def msc_forward(x_nchw, p):
    # NCHW -> NHWC, bf16 activations end-to-end (f32 accumulation in kernels)
    x = jnp.transpose(x_nchw, (0, 2, 3, 1)).astype(jnp.bfloat16)
    c1, c2, c3, c4 = resnet_fwd(x, p["encoder"])

    fore = conv_bn_relu_fwd(c4, p["fg1"])
    fore = conv_bn_relu_fwd(fore, p["fg2"])
    out_two = jnp.argmax(fore, axis=-1, keepdims=True).astype(jnp.bfloat16)

    # adaptive avg pool (1,1) + classifier (kept f32 for the logits)
    y = jnp.mean(c4.astype(jnp.float32), axis=(1, 2))
    y = pallas_matmul_fused(y, p["cls1"]["w"], p["cls1"]["scale"], p["cls1"]["shift"],
                            n_true=p["cls1"]["n"], out_dtype=jnp.float32)
    y = pallas_matmul_fused(y, p["cls2"]["w"], p["cls2"]["scale"], p["cls2"]["shift"],
                            n_true=p["cls2"]["n"], out_dtype=jnp.float32)
    temp_y = jax.nn.sigmoid(y)[:, None, None, :]

    z = c4 * out_two
    z = conv_bn_relu_fwd(z, p["red1"])
    temp_z = c3 * out_two
    z = jnp.concatenate([z, temp_z], axis=-1)
    z = conv_bn_relu_fwd(z, p["sem1"])

    h2, w2 = c2.shape[1], c2.shape[2]
    z = interp_bilinear_ac(z, h2, w2)
    out_two = interp_bilinear_ac(out_two, h2, w2)
    temp_z = conv_bn_relu_fwd(c2, p["red2"])
    temp_z = temp_z * out_two
    z = jnp.concatenate([z, temp_z], axis=-1)
    z = conv_bn_relu_fwd(z, p["sem2"])

    h1, w1 = c1.shape[1], c1.shape[2]
    z = interp_bilinear_ac(z, h1, w1)
    out_two = interp_bilinear_ac(out_two, h1, w1)
    temp_z = conv_bn_relu_fwd(c1, p["red3"])
    temp_z = temp_z * out_two
    z = jnp.concatenate([z, temp_z], axis=-1)
    z = conv_bn_relu_fwd(z, p["sem3"])

    z = z.astype(jnp.float32) * temp_y
    # return NCHW like the PyTorch module
    return [jnp.transpose(z, (0, 3, 1, 2)),
            y,
            jnp.transpose(fore, (0, 3, 1, 2)).astype(jnp.float32)]


# ----------------------------------------------------------------------------
if __name__ == "__main__":
    num_classes = 5
    params = init_msc(seed=0, num_classes=num_classes)

    x = jax.random.normal(jax.random.PRNGKey(0), (2, 3, 64, 64), jnp.float32)

    z, y, fore_x = msc_forward(x, params)
    jax.block_until_ready((z, y, fore_x))

    assert z.shape == (2, num_classes, 16, 16), z.shape
    assert y.shape == (2, num_classes), y.shape
    assert fore_x.shape == (2, 2, 4, 4), fore_x.shape
    assert bool(jnp.all(jnp.isfinite(z))) and bool(jnp.all(jnp.isfinite(y)))
    print("KERNEL_OK")
</pallas_src>

<mosaic_0001>
module attributes {stable_mosaic.version = 11 : i64} {
  func.func @_mm_kernel(%arg0: i32, %arg1: i32, %arg2: i32, %arg3: memref<512x256xbf16, #tpu.memory_space<vmem>>, %arg4: memref<256x128xbf16, #tpu.memory_space<vmem>>, %arg5: memref<1x128xf32, #tpu.memory_space<vmem>>, %arg6: memref<1x128xf32, #tpu.memory_space<vmem>>, %arg7: memref<1x128xf32, #tpu.memory_space<vmem>>, %arg8: memref<512x128xbf16, #tpu.memory_space<vmem>>, %arg9: memref<512x128xf32, #tpu.memory_space<vmem>>) attributes {dimension_semantics = [#tpu.dimension_semantics<parallel>, #tpu.dimension_semantics<parallel>, #tpu.dimension_semantics<arbitrary>], iteration_bounds = array<i64: 4, 1, 1>, scalar_prefetch = 0 : i64, scratch_operands = 1 : i64, tpu.core_type = #tpu.core_type<tc>, window_params = [{transform_indices = @transform_0, window_bounds = array<i64: 512, 256>}, {transform_indices = @transform_1, window_bounds = array<i64: 256, 128>}, {transform_indices = @transform_2, window_bounds = array<i64: 1, 128>}, {transform_indices = @transform_3, window_bounds = array<i64: 1, 128>}, {transform_indices = @transform_4, window_bounds = array<i64: 1, 128>}, {transform_indices = @transform_5, window_bounds = array<i64: 512, 128>}]} {
    %c0_i32 = arith.constant 0 : i32
    %0 = arith.cmpi eq, %arg2, %c0_i32 : i32
    %1 = arith.extui %0 : i1 to i32
    %c0_i32_0 = arith.constant 0 : i32
    %2 = arith.cmpi ne, %1, %c0_i32_0 : i32
    scf.if %2 {
      %cst_10 = arith.constant 0.000000e+00 : f32
      %12 = vector.broadcast %cst_10 : f32 to vector<512x128xf32>
      %c0_11 = arith.constant 0 : index
      %c0_12 = arith.constant 0 : index
      %13 = vector.load %arg9[%c0_11, %c0_12] : memref<512x128xf32, #tpu.memory_space<vmem>>, vector<512x128xf32>
      tpu.vector_store %arg9[%c0_11, %c0_12], %12 {strides = array<i32>} : memref<512x128xf32, #tpu.memory_space<vmem>>, vector<512x128xf32>,
    } else {
    }
    %c0 = arith.constant 0 : index
    %c0_1 = arith.constant 0 : index
    %3 = vector.load %arg9[%c0, %c0_1] : memref<512x128xf32, #tpu.memory_space<vmem>>, vector<512x128xf32>
    %c0_2 = arith.constant 0 : index
    %c0_3 = arith.constant 0 : index
    %4 = vector.load %arg3[%c0_2, %c0_3] : memref<512x256xbf16, #tpu.memory_space<vmem>>, vector<512x256xbf16>
    %c0_4 = arith.constant 0 : index
    %c0_5 = arith.constant 0 : index
    %5 = vector.load %arg4[%c0_4, %c0_5] : memref<256x128xbf16, #tpu.memory_space<vmem>>, vector<256x128xbf16>
    %cst = arith.constant dense<0.000000e+00> : vector<512x128xf32>
    %6 = tpu.matmul %4, %5, %cst {dimension_numbers = #tpu.dot_dimension_numbers<[1], [0], [0], [1], [0, 0, 1, 1], [], []>} : vector<512x256xbf16>, vector<256x128xbf16>, vector<512x128xf32> -> vector<512x128xf32>
    %7 = arith.addf %3, %6 : vector<512x128xf32>
    %c0_6 = arith.constant 0 : index
    %c0_7 = arith.constant 0 : index
    %8 = vector.load %arg9[%c0_6, %c0_7] : memref<512x128xf32, #tpu.memory_space<vmem>>, vector<512x128xf32>
    tpu.vector_store %arg9[%c0_6, %c0_7], %7 {strides = array<i32>} : memref<512x128xf32, #tpu.memory_space<vmem>>, vector<512x128xf32>,
    %c0_i32_8 = arith.constant 0 : i32
    %9 = arith.cmpi eq, %arg2, %c0_i32_8 : i32
    %10 = arith.extui %9 : i1 to i32
    %c0_i32_9 = arith.constant 0 : i32
    %11 = arith.cmpi ne, %10, %c0_i32_9 : i32
    scf.if %11 {
      %c0_10 = arith.constant 0 : index
      %c0_11 = arith.constant 0 : index
      %12 = vector.load %arg9[%c0_10, %c0_11] : memref<512x128xf32, #tpu.memory_space<vmem>>, vector<512x128xf32>
      %c0_12 = arith.constant 0 : index
      %c0_13 = arith.constant 0 : index
      %13 = vector.load %arg5[%c0_12, %c0_13] : memref<1x128xf32, #tpu.memory_space<vmem>>, vector<1x128xf32>
      %14 = vector.broadcast %13 : vector<1x128xf32> to vector<512x128xf32>
      %15 = arith.mulf %12, %14 : vector<512x128xf32>
      %c0_14 = arith.constant 0 : index
      %c0_15 = arith.constant 0 : index
      %16 = vector.load %arg6[%c0_14, %c0_15] : memref<1x128xf32, #tpu.memory_space<vmem>>, vector<1x128xf32>
      %17 = vector.broadcast %16 : vector<1x128xf32> to vector<512x128xf32>
      %18 = arith.addf %15, %17 : vector<512x128xf32>
      %cst_16 = arith.constant 0.000000e+00 : f32
      %19 = vector.broadcast %cst_16 : f32 to vector<512x128xf32>
      %20 = arith.cmpf oge, %18, %19 : vector<512x128xf32>
      %c0_17 = arith.constant 0 : index
      %c0_18 = arith.constant 0 : index
      %21 = vector.load %arg7[%c0_17, %c0_18] : memref<1x128xf32, #tpu.memory_space<vmem>>, vector<1x128xf32>
      %22 = vector.broadcast %21 : vector<1x128xf32> to vector<512x128xf32>
      %23 = arith.mulf %22, %18 : vector<512x128xf32>
      %24 = arith.select %20, %18, %23 : vector<512x128xi1>, vector<512x128xf32>
      %25 = arith.truncf %24 : vector<512x128xf32> to vector<512x128xbf16>
      %c0_19 = arith.constant 0 : index
      %c0_20 = arith.constant 0 : index
      %26 = vector.load %arg8[%c0_19, %c0_20] : memref<512x128xbf16, #tpu.memory_space<vmem>>, vector<512x128xbf16>
      tpu.vector_store %arg8[%c0_19, %c0_20], %25 {strides = array<i32>} : memref<512x128xbf16, #tpu.memory_space<vmem>>, vector<512x128xbf16>,
    } else {
    }
    return
  }
  func.func @transform_0(%arg0: i32, %arg1: i32, %arg2: i32) -> (i32, i32) {
    %c0_i32 = arith.constant 0 : i32
    return %arg0, %arg2 : i32, i32
  }
  func.func @transform_1(%arg0: i32, %arg1: i32, %arg2: i32) -> (i32, i32) {
    %c0_i32 = arith.constant 0 : i32
    return %arg2, %arg1 : i32, i32
  }
  func.func @transform_2(%arg0: i32, %arg1: i32, %arg2: i32) -> (i32, i32) {
    %c0_i32 = arith.constant 0 : i32
    %c0_i32_0 = arith.constant 0 : i32
    return %c0_i32, %arg1 : i32, i32
  }
  func.func @transform_3(%arg0: i32, %arg1: i32, %arg2: i32) -> (i32, i32) {
    %c0_i32 = arith.constant 0 : i32
    %c0_i32_0 = arith.constant 0 : i32
    return %c0_i32, %arg1 : i32, i32
  }
  func.func @transform_4(%arg0: i32, %arg1: i32, %arg2: i32) -> (i32, i32) {
    %c0_i32 = arith.constant 0 : i32
    %c0_i32_0 = arith.constant 0 : i32
    return %c0_i32, %arg1 : i32, i32
  }
  func.func @transform_5(%arg0: i32, %arg1: i32, %arg2: i32) -> (i32, i32) {
    %c0_i32 = arith.constant 0 : i32
    return %arg0, %arg1 : i32, i32
  }
}

</mosaic_0001>

<llo_original>
// kernel: pallas_matmul_fused.1
$region0: #{pallas_matmul_fused.1}
  #allocation0 [shape = 'u32[]', space=smem, size = 0x4, offset = 0x4, fixed_abs, tag = 'smem constant byte address 0x4 - core index']
  #allocation1 [shape = 'u32[144,128]{1,0:T(1,128)}', space=vmem, size = 0x12000, scoped, tag = 'internal scratch']
  #allocation2 [shape = 'f32[512,128]{1,0:T(8,128)}', space=vmem, size = 0x40000, scoped, tag = 'scratch operand']
  %s0 = inlined_call_operand.vmem [shape: bf16[2048,256], index: 0, kind: input, shape index: {}]
  %s1 = inlined_call_operand.vmem [shape: bf16[256,128], index: 1, kind: input, shape index: {}]
  %s2 = inlined_call_operand.vmem [shape: f32[1,128], index: 2, kind: input, shape index: {}]
  %s3 = inlined_call_operand.vmem [shape: f32[1,128], index: 3, kind: input, shape index: {}]
  %s4 = inlined_call_operand.vmem [shape: f32[1,128], index: 4, kind: input, shape index: {}]
  %s5 = inlined_call_operand.vmem [shape: bf16[2048,128], index: 5, kind: output, shape index: {}]
  %s6 = sld [smem:[#allocation0]]
  $region61: #{pallas_matmul_fused.1} parent=0
    _
  %s8 = ssub.s32 1, %s6
  %s9 = scalar_select 0, %s8, %s6
  loop: start=0, step=1, limit=6
  $region2: #{pallas_matmul_fused.1} parent=0 // loop_pre_header
    _
  $region3: #{pallas_matmul_fused.1} parent=0 // loop_header
    %s11 = sphi 0, %s15
    %p12 = scmp.ge.s32.totalorder %s11, 6
    %s18 = sphi 0, %s37
    %s19 = sphi 0, %s33
    %s20 = sphi 0, %s29
    %s21 = sphi 0, %s18
    %s22 = sphi 0, %s19
    %s23 = sphi 0, %s20
    %s24 = sphi 0, %s21
    %s25 = sphi 0, %s22
    %s26 = sphi 0, %s23
    %s42 = sphi 0, %s44
    %s45 = sphi 0, %s42
    %s46 = sphi 0, %s45
    %s62 = sphi 0, %s46
    %s70 = sphi 0, %s72
    %s73 = sphi 0, %s70
    %s74 = sphi 0, %s73
    %s90 = sphi 0, %s74
    %s96 = sphi 0, %s98
    %s99 = sphi 0, %s96
    %s100 = sphi 0, %s99
    %s116 = sphi 0, %s100
    %s122 = sphi 0, %s124
    %s125 = sphi 0, %s122
    %s126 = sphi 0, %s125
    %s142 = sphi 0, %s126
    %s148 = sphi 0, %s150
    %s151 = sphi 0, %s148
    %s152 = sphi 0, %s151
    %s168 = sphi 0, %s152
    %s176 = sphi 0, %s178
    %s179 = sphi 0, %s176
    %s180 = sphi 0, %s179
    %s196 = sphi 0, %s180
  $region4: #{pallas_matmul_fused.1} parent=0 // loop_header_branch
    %14 = sbr.rel (%p12) target = $region8
  $region5: #{pallas_matmul_fused.1} parent=0 // loop_body
    %s16 = ssub.s32 %s11, 1
    %s17 = ssub.s32 %s11, 2
    %s27 = sadd.s32 1, %s20
    %p28 = scmp.ge.s32.totalorder %s27, 1
    %s29 = scalar_select %p28, 0, %s27
    %s30 = sadd.s32 1, %s19
    %s31 = scalar_select %p28, %s30, %s19
    %p32 = scmp.ge.s32.totalorder %s31, 1
    %s33 = scalar_select %p32, 0, %s31
    %s34 = sadd.s32 1, %s18
    %s35 = scalar_select %p32, %s34, %s18
    %p36 = scmp.ge.s32.totalorder %s35, 4
    %s37 = scalar_select %p36, 0, %s35
    %s38 = ssub.s32 %s18, %s37
    %s39 = ssub.s32 %s20, %s29
    %s40 = sor.u32 %s38, %s39
    %p41 = scmp.eq.s32.totalorder %s40, 0
    %s43 = sadd.s32 %s42, 1
    %s44 = scalar_select %p41, %s42, %s43
    %p47 = pneg %p41
    %p48 = scmp.eq.s32.totalorder %s11, 3
    %p49 = por %p47, %p48
    %p50 = scmp.ne.s32.totalorder %s42, %s45
    %p51 = scmp.eq.s32.totalorder %s11, 0
    %p52 = por %p50, %p51
    %p53 = scmp.ne.s32.totalorder %s42, %s45
    %p54 = scmp.eq.s32.totalorder %s16, 3
    %p55 = por %p53, %p54
    %p56 = scmp.ne.s32.totalorder %s45, %s46
    %p57 = scmp.eq.s32.totalorder %s16, 0
    %p58 = por %p56, %p57
    %p59 = scmp.ne.s32.totalorder %s45, %s46
    %p60 = scmp.eq.s32.totalorder %s17, 3
    %p61 = por %p59, %p60
    %p63 = scmp.ne.s32.totalorder %s46, %s62
    %p64 = scmp.eq.s32.totalorder %s17, 0
    %p65 = por %p63, %p64
    %s66 = ssub.s32 %s20, %s29
    %s67 = ssub.s32 %s19, %s33
    %s68 = sor.u32 %s66, %s67
    %p69 = scmp.eq.s32.totalorder %s68, 0
    %s71 = sadd.s32 %s70, 1
    %s72 = scalar_select %p69, %s70, %s71
    %p75 = pneg %p69
    %p76 = scmp.eq.s32.totalorder %s11, 3
    %p77 = por %p75, %p76
    %p78 = scmp.ne.s32.totalorder %s70, %s73
    %p79 = scmp.eq.s32.totalorder %s11, 0
    %p80 = por %p78, %p79
    %p81 = scmp.ne.s32.totalorder %s70, %s73
    %p82 = scmp.eq.s32.totalorder %s16, 3
    %p83 = por %p81, %p82
    %p84 = scmp.ne.s32.totalorder %s73, %s74
    %p85 = scmp.eq.s32.totalorder %s16, 0
    %p86 = por %p84, %p85
    %p87 = scmp.ne.s32.totalorder %s73, %s74
    %p88 = scmp.eq.s32.totalorder %s17, 3
    %p89 = por %p87, %p88
    %p91 = scmp.ne.s32.totalorder %s74, %s90
    %p92 = scmp.eq.s32.totalorder %s17, 0
    %p93 = por %p91, %p92
    %s94 = ssub.s32 %s19, %s33
    %p95 = scmp.eq.s32.totalorder %s94, 0
    %s97 = sadd.s32 %s96, 1
    %s98 = scalar_select %p95, %s96, %s97
    %p101 = pneg %p95
    %p102 = scmp.eq.s32.totalorder %s11, 3
    %p103 = por %p101, %p102
    %p104 = scmp.ne.s32.totalorder %s96, %s99
    %p105 = scmp.eq.s32.totalorder %s11, 0
    %p106 = por %p104, %p105
    %p107 = scmp.ne.s32.totalorder %s96, %s99
    %p108 = scmp.eq.s32.totalorder %s16, 3
    %p109 = por %p107, %p108
    %p110 = scmp.ne.s32.totalorder %s99, %s100
    %p111 = scmp.eq.s32.totalorder %s16, 0
    %p112 = por %p110, %p111
    %p113 = scmp.ne.s32.totalorder %s99, %s100
    %p114 = scmp.eq.s32.totalorder %s17, 3
    %p115 = por %p113, %p114
    %p117 = scmp.ne.s32.totalorder %s100, %s116
    %p118 = scmp.eq.s32.totalorder %s17, 0
    %p119 = por %p117, %p118
    %s120 = ssub.s32 %s19, %s33
    %p121 = scmp.eq.s32.totalorder %s120, 0
    %s123 = sadd.s32 %s122, 1
    %s124 = scalar_select %p121, %s122, %s123
    %p127 = pneg %p121
    %p128 = scmp.eq.s32.totalorder %s11, 3
    %p129 = por %p127, %p128
    %p130 = scmp.ne.s32.totalorder %s122, %s125
    %p131 = scmp.eq.s32.totalorder %s11, 0
    %p132 = por %p130, %p131
    %p133 = scmp.ne.s32.totalorder %s122, %s125
    %p134 = scmp.eq.s32.totalorder %s16, 3
    %p135 = por %p133, %p134
    %p136 = scmp.ne.s32.totalorder %s125, %s126
    %p137 = scmp.eq.s32.totalorder %s16, 0
    %p138 = por %p136, %p137
    %p139 = scmp.ne.s32.totalorder %s125, %s126
    %p140 = scmp.eq.s32.totalorder %s17, 3
    %p141 = por %p139, %p140
    %p143 = scmp.ne.s32.totalorder %s126, %s142
    %p144 = scmp.eq.s32.totalorder %s17, 0
    %p145 = por %p143, %p144
    %s146 = ssub.s32 %s19, %s33
    %p147 = scmp.eq.s32.totalorder %s146, 0
    %s149 = sadd.s32 %s148, 1
    %s150 = scalar_select %p147, %s148, %s149
    %p153 = pneg %p147
    %p154 = scmp.eq.s32.totalorder %s11, 3
    %p155 = por %p153, %p154
    %p156 = scmp.ne.s32.totalorder %s148, %s151
    %p157 = scmp.eq.s32.totalorder %s11, 0
    %p158 = por %p156, %p157
    %p159 = scmp.ne.s32.totalorder %s148, %s151
    %p160 = scmp.eq.s32.totalorder %s16, 3
    %p161 = por %p159, %p160
    %p162 = scmp.ne.s32.totalorder %s151, %s152
    %p163 = scmp.eq.s32.totalorder %s16, 0
    %p164 = por %p162, %p163
    %p165 = scmp.ne.s32.totalorder %s151, %s152
    %p166 = scmp.eq.s32.totalorder %s17, 3
    %p167 = por %p165, %p166
    %p169 = scmp.ne.s32.totalorder %s152, %s168
    %p170 = scmp.eq.s32.totalorder %s17, 0
    %p171 = por %p169, %p170
    %s172 = ssub.s32 %s18, %s37
    %s173 = ssub.s32 %s19, %s33
    %s174 = sor.u32 %s172, %s173
    %p175 = scmp.eq.s32.totalorder %s174, 0
    %s177 = sadd.s32 %s176, 1
    %s178 = scalar_select %p175, %s176, %s177
    %p181 = pneg %p175
    %p182 = scmp.eq.s32.totalorder %s11, 3
    %p183 = por %p181, %p182
    %p184 = scmp.ne.s32.totalorder %s176, %s179
    %p185 = scmp.eq.s32.totalorder %s11, 0
    %p186 = por %p184, %p185
    %p187 = scmp.ne.s32.totalorder %s176, %s179
    %p188 = scmp.eq.s32.totalorder %s16, 3
    %p189 = por %p187, %p188
    %p190 = scmp.ne.s32.totalorder %s179, %s180
    %p191 = scmp.eq.s32.totalorder %s16, 0
    %p192 = por %p190, %p191
    %p193 = scmp.ne.s32.totalorder %s179, %s180
    %p194 = scmp.eq.s32.totalorder %s17, 3
    %p195 = por %p193, %p194
    %p197 = scmp.ne.s32.totalorder %s180, %s196
    %p198 = scmp.eq.s32.totalorder %s17, 0
    %p199 = por %p197, %p198
    %p200 = scmp.le.s32.totalorder 1, %s11
    %p201 = scmp.lt.s32.totalorder %s11, 5
    %p202 = pnand %p200, %p201
    %p203 = pneg %p202
    // Predicated region
    $region9: #{pallas_matmul_fused.1} parent=5 // pred_check
      _
    $region10: #{pallas_matmul_fused.1} parent=5 // pred_check_branch
      %205 = sbr.rel (%p202) target = $region12
    $region11: #{pallas_matmul_fused.1} parent=5 // pred_region
      %s206 = ssub.s32 %s11, 1
      // Predicated region
      $region13: #{pallas_matmul_fused.1} parent=11 // pred_check
        %p207 = pneg %p86
      $region14: #{pallas_matmul_fused.1} parent=11 // pred_check_branch
        %209 = sbr.rel (%p207) target = $region16
      $region15: #{pallas_matmul_fused.1} parent=11 // pred_region
        %s210 = smul.u32 32, %s23
        %p211 = scmp.lt.s32.totalorder %s210, 31
        %s212 = scalar_select %p211, %s210, 31
        %p213 = scmp.lt.s32.totalorder %s22, 0
        %s214 = scalar_select %p213, %s22, 0
        %s215 = sadd.s32 %s214, %s212
        %s216 = smul.addr %s215, 4
        %s217 = scalar_lea.vmem %s1, %s216
        %s218 = smul.u32 32, %s23
      $region16: #{pallas_matmul_fused.1} parent=11 // pred_fallthru
        _
      // Predicated region
      $region17: #{pallas_matmul_fused.1} parent=11 // pred_check
        %p219 = pneg %p112
      $region18: #{pallas_matmul_fused.1} parent=11 // pred_check_branch
        %221 = sbr.rel (%p219) target = $region20
      $region19: #{pallas_matmul_fused.1} parent=11 // pred_region
        %p222 = scmp.lt.s32.totalorder %s22, 0
        %s223 = scalar_select %p222, %s22, 0
        %s224 = scalar_lea.vmem %s2, %s223
      $region20: #{pallas_matmul_fused.1} parent=11 // pred_fallthru
        _
      // Predicated region
      $region21: #{pallas_matmul_fused.1} parent=11 // pred_check
        %p225 = pneg %p138
      $region22: #{pallas_matmul_fused.1} parent=11 // pred_check_branch
        %227 = sbr.rel (%p225) target = $region24
      $region23: #{pallas_matmul_fused.1} parent=11 // pred_region
        %p228 = scmp.lt.s32.totalorder %s22, 0
        %s229 = scalar_select %p228, %s22, 0
        %s230 = scalar_lea.vmem %s3, %s229
      $region24: #{pallas_matmul_fused.1} parent=11 // pred_fallthru
        _
      // Predicated region
      $region25: #{pallas_matmul_fused.1} parent=11 // pred_check
        %p231 = pneg %p164
      $region26: #{pallas_matmul_fused.1} parent=11 // pred_check_branch
        %233 = sbr.rel (%p231) target = $region28
      $region27: #{pallas_matmul_fused.1} parent=11 // pred_region
        %p234 = scmp.lt.s32.totalorder %s22, 0
        %s235 = scalar_select %p234, %s22, 0
        %s236 = scalar_lea.vmem %s4, %s235
      $region28: #{pallas_matmul_fused.1} parent=11 // pred_fallthru
        _
    $region12: #{pallas_matmul_fused.1} parent=5 // pred_fallthru
      _
    %p237 = scmp.lt.s32.totalorder %s11, 4
    // Predicated region
    $region29: #{pallas_matmul_fused.1} parent=5 // pred_check
      %p238 = pneg %p237
    $region30: #{pallas_matmul_fused.1} parent=5 // pred_check_branch
      %240 = sbr.rel (%p238) target = $region32
    $region31: #{pallas_matmul_fused.1} parent=5 // pred_region
      // Predicated region
      $region33: #{pallas_matmul_fused.1} parent=31 // pred_check
        %p241 = pneg %p52
      $region34: #{pallas_matmul_fused.1} parent=31 // pred_check_branch
        %243 = sbr.rel (%p241) target = $region36
      $region35: #{pallas_matmul_fused.1} parent=31 // pred_region
        %s244 = smul.u32 64, %s18
        %s245 = smul.u32 2, %s20
        %p246 = scmp.lt.s32.totalorder %s244, 255
        %s247 = scalar_select %p246, %s244, 255
        %p248 = scmp.lt.s32.totalorder %s245, 1
        %s249 = scalar_select %p248, %s245, 1
        %s250 = smul.addr %s247, 2
        %s251 = sadd.s32 %s249, %s250
        %s252 = smul.addr %s251, 4
        %s253 = scalar_lea.vmem %s0, %s252
        %s254 = smul.u32 64, %s18
        %s255 = smul.u32 2, %s20
      $region36: #{pallas_matmul_fused.1} parent=31 // pred_fallthru
        _
    $region32: #{pallas_matmul_fused.1} parent=5 // pred_fallthru
      _
    %p256 = scmp.le.s32.totalorder 1, %s11
    %p257 = scmp.lt.s32.totalorder %s11, 5
    %p258 = pnand %p256, %p257
    %p259 = pneg %p258
    // Predicated region
    $region37: #{pallas_matmul_fused.1} parent=5 // pred_check
      _
    $region38: #{pallas_matmul_fused.1} parent=5 // pred_check_branch
      %261 = sbr.rel (%p258) target = $region40
    $region39: #{pallas_matmul_fused.1} parent=5 // pred_region
      %s262 = ssub.s32 %s11, 1
      %s263 = smul.u32 64, %s21
      %s264 = smul.u32 2, %s23
      %p265 = scmp.lt.s32.totalorder %s263, 255
      %s266 = scalar_select %p265, %s263, 255
      %p267 = scmp.lt.s32.totalorder %s264, 1
      %s268 = scalar_select %p267, %s264, 1
      %s269 = smul.addr %s266, 2
      %s270 = sadd.s32 %s268, %s269
      %s271 = smul.addr %s270, 4
      %s272 = scalar_lea.vmem %s0, %s271
      %p273 = pneg %p58
      %p274 = pneg %p55
      %s275 = smul.u32 32, %s23
      %p276 = scmp.lt.s32.totalorder %s275, 31
      %s277 = scalar_select %p276, %s275, 31
      %p278 = scmp.lt.s32.totalorder %s22, 0
      %s279 = scalar_select %p278, %s22, 0
      %s280 = sadd.s32 %s279, %s277
      %s281 = smul.addr %s280, 4
      %s282 = scalar_lea.vmem %s1, %s281
      %p283 = pneg %p86
      %p284 = pneg %p83
      %p285 = scmp.lt.s32.totalorder %s22, 0
      %s286 = scalar_select %p285, %s22, 0
      %s287 = scalar_lea.vmem %s2, %s286
      %p288 = pneg %p112
      %p289 = pneg %p109
      %p290 = scmp.lt.s32.totalorder %s22, 0
      %s291 = scalar_select %p290, %s22, 0
      %s292 = scalar_lea.vmem %s3, %s291
      %p293 = pneg %p138
      %p294 = pneg %p135
      %p295 = scmp.lt.s32.totalorder %s22, 0
      %s296 = scalar_select %p295, %s22, 0
      %s297 = scalar_lea.vmem %s4, %s296
      %p298 = pneg %p164
      %p299 = pneg %p161
      %p300 = pneg %p192
      %p301 = pneg %p189
      %s302 = smul.u32 64, %s21
      %p303 = scmp.lt.s32.totalorder %s302, 255
      %s304 = scalar_select %p303, %s302, 255
      %p305 = scmp.lt.s32.totalorder %s22, 0
      %s306 = scalar_select %p305, %s22, 0
      %s307 = sadd.s32 %s306, %s304
      %s308 = smul.addr %s307, 4
      %s309 = scalar_lea.vmem %s5, %s308
      %s310 = smul.u32 64, %s21
      %s311 = smul.u32 2, %s23
      %p312 = scmp.lt.s32.totalorder %s310, 255
      %s313 = scalar_select %p312, %s310, 255
      %p314 = scmp.lt.s32.totalorder %s311, 1
      %s315 = scalar_select %p314, %s311, 1
      %s316 = smul.addr %s313, 2
      %s317 = sadd.s32 %s315, %s316
      %s318 = smul.addr %s317, 4
      %s319 = scalar_lea.vmem %s0, %s318
      %s320 = smul.u32 64, %s21
      %s321 = smul.u32 2, %s23
      %s322 = smul.u32 32, %s23
      %p323 = scmp.lt.s32.totalorder %s322, 31
      %s324 = scalar_select %p323, %s322, 31
      %p325 = scmp.lt.s32.totalorder %s22, 0
      %s326 = scalar_select %p325, %s22, 0
      %s327 = sadd.s32 %s326, %s324
      %s328 = smul.addr %s327, 4
      %s329 = scalar_lea.vmem %s1, %s328
      %s330 = smul.u32 32, %s23
      %p331 = scmp.lt.s32.totalorder %s22, 0
      %s332 = scalar_select %p331, %s22, 0
      %s333 = scalar_lea.vmem %s2, %s332
      %p334 = scmp.lt.s32.totalorder %s22, 0
      %s335 = scalar_select %p334, %s22, 0
      %s336 = scalar_lea.vmem %s3, %s335
      %p337 = scmp.lt.s32.totalorder %s22, 0
      %s338 = scalar_select %p337, %s22, 0
      %s339 = scalar_lea.vmem %s4, %s338
      %s340 = smul.u32 64, %s21
      %p341 = scmp.lt.s32.totalorder %s340, 255
      %s342 = scalar_select %p341, %s340, 255
      %p343 = scmp.lt.s32.totalorder %s22, 0
      %s344 = scalar_select %p343, %s22, 0
      %s345 = sadd.s32 %s344, %s342
      %s346 = smul.addr %s345, 4
      %s347 = scalar_lea.vmem %s5, %s346
      %s348 = smul.u32 64, %s21
      %p350 = scmp.eq.s32.totalorder %s23, 0
      // Predicated region
      $region41: #{pallas_matmul_fused.1} parent=39 // pred_check
        %p351 = pneg %p350
      $region42: #{pallas_matmul_fused.1} parent=39 // pred_check_branch
        %353 = sbr.rel (%p351) target = $region44
      $region43: #{pallas_matmul_fused.1} parent=39 // pred_region
        %354 = vst [vmem:[#allocation2] sm:$0xff] 0.0
        %355 = vst [vmem:[#allocation2 + $0x8] sm:$0xff] 0.0
        %356 = vst [vmem:[#allocation2 + $0x10] sm:$0xff] 0.0
        %357 = vst [vmem:[#allocation2 + $0x18] sm:$0xff] 0.0
        %358 = vst [vmem:[#allocation2 + $0x20] sm:$0xff] 0.0
        %359 = vst [vmem:[#allocation2 + $0x28] sm:$0xff] 0.0
        %360 = vst [vmem:[#allocation2 + $0x30] sm:$0xff] 0.0
        %361 = vst [vmem:[#allocation2 + $0x38] sm:$0xff] 0.0
        %362 = vst [vmem:[#allocation2 + $0x40] sm:$0xff] 0.0
        %363 = vst [vmem:[#allocation2 + $0x48] sm:$0xff] 0.0
        %364 = vst [vmem:[#allocation2 + $0x50] sm:$0xff] 0.0
        %365 = vst [vmem:[#allocation2 + $0x58] sm:$0xff] 0.0
        %366 = vst [vmem:[#allocation2 + $0x60] sm:$0xff] 0.0
        %367 = vst [vmem:[#allocation2 + $0x68] sm:$0xff] 0.0
        %368 = vst [vmem:[#allocation2 + $0x70] sm:$0xff] 0.0
        %369 = vst [vmem:[#allocation2 + $0x78] sm:$0xff] 0.0
        %370 = vst [vmem:[#allocation2 + $0x80] sm:$0xff] 0.0
        %371 = vst [vmem:[#allocation2 + $0x88] sm:$0xff] 0.0
        %372 = vst [vmem:[#allocation2 + $0x90] sm:$0xff] 0.0
        %373 = vst [vmem:[#allocation2 + $0x98] sm:$0xff] 0.0
        %374 = vst [vmem:[#allocation2 + $0xa0] sm:$0xff] 0.0
        %375 = vst [vmem:[#allocation2 + $0xa8] sm:$0xff] 0.0
        %376 = vst [vmem:[#allocation2 + $0xb0] sm:$0xff] 0.0
        %377 = vst [vmem:[#allocation2 + $0xb8] sm:$0xff] 0.0
        %378 = vst [vmem:[#allocation2 + $0xc0] sm:$0xff] 0.0
        %379 = vst [vmem:[#allocation2 + $0xc8] sm:$0xff] 0.0
        %380 = vst [vmem:[#allocation2 + $0xd0] sm:$0xff] 0.0
        %381 = vst [vmem:[#allocation2 + $0xd8] sm:$0xff] 0.0
        %382 = vst [vmem:[#allocation2 + $0xe0] sm:$0xff] 0.0
        %383 = vst [vmem:[#allocation2 + $0xe8] sm:$0xff] 0.0
        %384 = vst [vmem:[#allocation2 + $0xf0] sm:$0xff] 0.0
        %385 = vst [vmem:[#allocation2 + $0xf8] sm:$0xff] 0.0
        %386 = vst [vmem:[#allocation2 + $0x100] sm:$0xff] 0.0
        %387 = vst [vmem:[#allocation2 + $0x108] sm:$0xff] 0.0
        %388 = vst [vmem:[#allocation2 + $0x110] sm:$0xff] 0.0
        %389 = vst [vmem:[#allocation2 + $0x118] sm:$0xff] 0.0
        %390 = vst [vmem:[#allocation2 + $0x120] sm:$0xff] 0.0
        %391 = vst [vmem:[#allocation2 + $0x128] sm:$0xff] 0.0
        %392 = vst [vmem:[#allocation2 + $0x130] sm:$0xff] 0.0
        %393 = vst [vmem:[#allocation2 + $0x138] sm:$0xff] 0.0
        %394 = vst [vmem:[#allocation2 + $0x140] sm:$0xff] 0.0
        %395 = vst [vmem:[#allocation2 + $0x148] sm:$0xff] 0.0
        %396 = vst [vmem:[#allocation2 + $0x150] sm:$0xff] 0.0
        %397 = vst [vmem:[#allocation2 + $0x158] sm:$0xff] 0.0
        %398 = vst [vmem:[#allocation2 + $0x160] sm:$0xff] 0.0
        %399 = vst [vmem:[#allocation2 + $0x168] sm:$0xff] 0.0
        %400 = vst [vmem:[#allocation2 + $0x170] sm:$0xff] 0.0
        %401 = vst [vmem:[#allocation2 + $0x178] sm:$0xff] 0.0
        %402 = vst [vmem:[#allocation2 + $0x180] sm:$0xff] 0.0
        %403 = vst [vmem:[#allocation2 + $0x188] sm:$0xff] 0.0
        %404 = vst [vmem:[#allocation2 + $0x190] sm:$0xff] 0.0
        %405 = vst [vmem:[#allocation2 + $0x198] sm:$0xff] 0.0
        %406 = vst [vmem:[#allocation2 + $0x1a0] sm:$0xff] 0.0
        %407 = vst [vmem:[#allocation2 + $0x1a8] sm:$0xff] 0.0
        %408 = vst [vmem:[#allocation2 + $0x1b0] sm:$0xff] 0.0
        %409 = vst [vmem:[#allocation2 + $0x1b8] sm:$0xff] 0.0
        %410 = vst [vmem:[#allocation2 + $0x1c0] sm:$0xff] 0.0
        %411 = vst [vmem:[#allocation2 + $0x1c8] sm:$0xff] 0.0
        %412 = vst [vmem:[#allocation2 + $0x1d0] sm:$0xff] 0.0
        %413 = vst [vmem:[#allocation2 + $0x1d8] sm:$0xff] 0.0
        %414 = vst [vmem:[#allocation2 + $0x1e0] sm:$0xff] 0.0
        %415 = vst [vmem:[#allocation2 + $0x1e8] sm:$0xff] 0.0
        %416 = vst [vmem:[#allocation2 + $0x1f0] sm:$0xff] 0.0
        %417 = vst [vmem:[#allocation2 + $0x1f8] sm:$0xff] 0.0
      $region44: #{pallas_matmul_fused.1} parent=39 // pred_fallthru
        _
      %v418 = vld [vmem:[#allocation2] sm:$0xff]
      %v419 = vld [vmem:[#allocation2 + $0x8] sm:$0xff]
      %v420 = vld [vmem:[#allocation2 + $0x10] sm:$0xff]
      %v421 = vld [vmem:[#allocation2 + $0x18] sm:$0xff]
      %v422 = vld [vmem:[#allocation2 + $0x20] sm:$0xff]
      %v423 = vld [vmem:[#allocation2 + $0x28] sm:$0xff]
      %v424 = vld [vmem:[#allocation2 + $0x30] sm:$0xff]
      %v425 = vld [vmem:[#allocation2 + $0x38] sm:$0xff]
      %v426 = vld [vmem:[#allocation2 + $0x40] sm:$0xff]
      %v427 = vld [vmem:[#allocation2 + $0x48] sm:$0xff]
      %v428 = vld [vmem:[#allocation2 + $0x50] sm:$0xff]
      %v429 = vld [vmem:[#allocation2 + $0x58] sm:$0xff]
      %v430 = vld [vmem:[#allocation2 + $0x60] sm:$0xff]
      %v431 = vld [vmem:[#allocation2 + $0x68] sm:$0xff]
      %v432 = vld [vmem:[#allocation2 + $0x70] sm:$0xff]
      %v433 = vld [vmem:[#allocation2 + $0x78] sm:$0xff]
      %v434 = vld [vmem:[#allocation2 + $0x80] sm:$0xff]
      %v435 = vld [vmem:[#allocation2 + $0x88] sm:$0xff]
      %v436 = vld [vmem:[#allocation2 + $0x90] sm:$0xff]
      %v437 = vld [vmem:[#allocation2 + $0x98] sm:$0xff]
      %v438 = vld [vmem:[#allocation2 + $0xa0] sm:$0xff]
      %v439 = vld [vmem:[#allocation2 + $0xa8] sm:$0xff]
      %v440 = vld [vmem:[#allocation2 + $0xb0] sm:$0xff]
      %v441 = vld [vmem:[#allocation2 + $0xb8] sm:$0xff]
      %v442 = vld [vmem:[#allocation2 + $0xc0] sm:$0xff]
      %v443 = vld [vmem:[#allocation2 + $0xc8] sm:$0xff]
      %v444 = vld [vmem:[#allocation2 + $0xd0] sm:$0xff]
      %v445 = vld [vmem:[#allocation2 + $0xd8] sm:$0xff]
      %v446 = vld [vmem:[#allocation2 + $0xe0] sm:$0xff]
      %v447 = vld [vmem:[#allocation2 + $0xe8] sm:$0xff]
      %v448 = vld [vmem:[#allocation2 + $0xf0] sm:$0xff]
      %v449 = vld [vmem:[#allocation2 + $0xf8] sm:$0xff]
      %v450 = vld [vmem:[#allocation2 + $0x100] sm:$0xff]
      %v451 = vld [vmem:[#allocation2 + $0x108] sm:$0xff]
      %v452 = vld [vmem:[#allocation2 + $0x110] sm:$0xff]
      %v453 = vld [vmem:[#allocation2 + $0x118] sm:$0xff]
      %v454 = vld [vmem:[#allocation2 + $0x120] sm:$0xff]
      %v455 = vld [vmem:[#allocation2 + $0x128] sm:$0xff]
      %v456 = vld [vmem:[#allocation2 + $0x130] sm:$0xff]
      %v457 = vld [vmem:[#allocation2 + $0x138] sm:$0xff]
      %v458 = vld [vmem:[#allocation2 + $0x140] sm:$0xff]
      %v459 = vld [vmem:[#allocation2 + $0x148] sm:$0xff]
      %v460 = vld [vmem:[#allocation2 + $0x150] sm:$0xff]
      %v461 = vld [vmem:[#allocation2 + $0x158] sm:$0xff]
      %v462 = vld [vmem:[#allocation2 + $0x160] sm:$0xff]
      %v463 = vld [vmem:[#allocation2 + $0x168] sm:$0xff]
      %v464 = vld [vmem:[#allocation2 + $0x170] sm:$0xff]
      %v465 = vld [vmem:[#allocation2 + $0x178] sm:$0xff]
      %v466 = vld [vmem:[#allocation2 + $0x180] sm:$0xff]
      %v467 = vld [vmem:[#allocation2 + $0x188] sm:$0xff]
      %v468 = vld [vmem:[#allocation2 + $0x190] sm:$0xff]
      %v469 = vld [vmem:[#allocation2 + $0x198] sm:$0xff]
      %v470 = vld [vmem:[#allocation2 + $0x1a0] sm:$0xff]
      %v471 = vld [vmem:[#allocation2 + $0x1a8] sm:$0xff]
      %v472 = vld [vmem:[#allocation2 + $0x1b0] sm:$0xff]
      %v473 = vld [vmem:[#allocation2 + $0x1b8] sm:$0xff]
      %v474 = vld [vmem:[#allocation2 + $0x1c0] sm:$0xff]
      %v475 = vld [vmem:[#allocation2 + $0x1c8] sm:$0xff]
      %v476 = vld [vmem:[#allocation2 + $0x1d0] sm:$0xff]
      %v477 = vld [vmem:[#allocation2 + $0x1d8] sm:$0xff]
      %v478 = vld [vmem:[#allocation2 + $0x1e0] sm:$0xff]
      %v479 = vld [vmem:[#allocation2 + $0x1e8] sm:$0xff]
      %v480 = vld [vmem:[#allocation2 + $0x1f0] sm:$0xff]
      %v481 = vld [vmem:[#allocation2 + $0x1f8] sm:$0xff]
      %v482 = vld [vmem:[%s319] sm:$0xff]
      %v483 = vld [vmem:[%s319 + $0x8] sm:$0xff]
      %v484 = vld [vmem:[%s319 + $0x10] sm:$0xff]
      %v485 = vld [vmem:[%s319 + $0x18] sm:$0xff]
      %v486 = vld [vmem:[%s319 + $0x20] sm:$0xff]
      %v487 = vld [vmem:[%s319 + $0x28] sm:$0xff]
      %v488 = vld [vmem:[%s319 + $0x30] sm:$0xff]
      %v489 = vld [vmem:[%s319 + $0x38] sm:$0xff]
      %v490 = vld [vmem:[%s319 + $0x40] sm:$0xff]
      %v491 = vld [vmem:[%s319 + $0x48] sm:$0xff]
      %v492 = vld [vmem:[%s319 + $0x50] sm:$0xff]
      %v493 = vld [vmem:[%s319 + $0x58] sm:$0xff]
      %v494 = vld [vmem:[%s319 + $0x60] sm:$0xff]
      %v495 = vld [vmem:[%s319 + $0x68] sm:$0xff]
      %v496 = vld [vmem:[%s319 + $0x70] sm:$0xff]
      %v497 = vld [vmem:[%s319 + $0x78] sm:$0xff]
      %v498 = vld [vmem:[%s319 + $0x80] sm:$0xff]
      %v499 = vld [vmem:[%s319 + $0x88] sm:$0xff]
      %v500 = vld [vmem:[%s319 + $0x90] sm:$0xff]
      %v501 = vld [vmem:[%s319 + $0x98] sm:$0xff]
      %v502 = vld [vmem:[%s319 + $0xa0] sm:$0xff]
      %v503 = vld [vmem:[%s319 + $0xa8] sm:$0xff]
      %v504 = vld [vmem:[%s319 + $0xb0] sm:$0xff]
      %v505 = vld [vmem:[%s319 + $0xb8] sm:$0xff]
      %v506 = vld [vmem:[%s319 + $0xc0] sm:$0xff]
      %v507 = vld [vmem:[%s319 + $0xc8] sm:$0xff]
      %v508 = vld [vmem:[%s319 + $0xd0] sm:$0xff]
      %v509 = vld [vmem:[%s319 + $0xd8] sm:$0xff]
      %v510 = vld [vmem:[%s319 + $0xe0] sm:$0xff]
      %v511 = vld [vmem:[%s319 + $0xe8] sm:$0xff]
      %v512 = vld [vmem:[%s319 + $0xf0] sm:$0xff]
      %v513 = vld [vmem:[%s319 + $0xf8] sm:$0xff]
      %v514 = vld [vmem:[%s319 + $0x100] sm:$0xff]
      %v515 = vld [vmem:[%s319 + $0x108] sm:$0xff]
      %v516 = vld [vmem:[%s319 + $0x110] sm:$0xff]
      %v517 = vld [vmem:[%s319 + $0x118] sm:$0xff]
      %v518 = vld [vmem:[%s319 + $0x120] sm:$0xff]
      %v519 = vld [vmem:[%s319 + $0x128] sm:$0xff]
      %v520 = vld [vmem:[%s319 + $0x130] sm:$0xff]
      %v521 = vld [vmem:[%s319 + $0x138] sm:$0xff]
      %v522 = vld [vmem:[%s319 + $0x140] sm:$0xff]
      %v523 = vld [vmem:[%s319 + $0x148] sm:$0xff]
      %v524 = vld [vmem:[%s319 + $0x150] sm:$0xff]
      %v525 = vld [vmem:[%s319 + $0x158] sm:$0xff]
      %v526 = vld [vmem:[%s319 + $0x160] sm:$0xff]
      %v527 = vld [vmem:[%s319 + $0x168] sm:$0xff]
      %v528 = vld [vmem:[%s319 + $0x170] sm:$0xff]
      %v529 = vld [vmem:[%s319 + $0x178] sm:$0xff]
      %v530 = vld [vmem:[%s319 + $0x180] sm:$0xff]
      %v531 = vld [vmem:[%s319 + $0x188] sm:$0xff]
      %v532 = vld [vmem:[%s319 + $0x190] sm:$0xff]
      %v533 = vld [vmem:[%s319 + $0x198] sm:$0xff]
      %v534 = vld [vmem:[%s319 + $0x1a0] sm:$0xff]
      %v535 = vld [vmem:[%s319 + $0x1a8] sm:$0xff]
      %v536 = vld [vmem:[%s319 + $0x1b0] sm:$0xff]
      %v537 = vld [vmem:[%s319 + $0x1b8] sm:$0xff]
      %v538 = vld [vmem:[%s319 + $0x1c0] sm:$0xff]
      %v539 = vld [vmem:[%s319 + $0x1c8] sm:$0xff]
      %v540 = vld [vmem:[%s319 + $0x1d0] sm:$0xff]
      %v541 = vld [vmem:[%s319 + $0x1d8] sm:$0xff]
      %v542 = vld [vmem:[%s319 + $0x1e0] sm:$0xff]
      %v543 = vld [vmem:[%s319 + $0x1e8] sm:$0xff]
      %v544 = vld [vmem:[%s319 + $0x1f0] sm:$0xff]
      %v545 = vld [vmem:[%s319 + $0x1f8] sm:$0xff]
      %v546 = vld [vmem:[%s329] sm:$0xf]
      %v547 = vld [vmem:[%s329 + $0x4] sm:$0xf]
      %v548 = vld [vmem:[%s329 + $0x8] sm:$0xf]
      %v549 = vld [vmem:[%s329 + $0xc] sm:$0xf]
      %v550 = vld [vmem:[%s329 + $0x10] sm:$0xf]
      %v551 = vld [vmem:[%s329 + $0x14] sm:$0xf]
      %v552 = vld [vmem:[%s329 + $0x18] sm:$0xf]
      %v553 = vld [vmem:[%s329 + $0x1c] sm:$0xf]
      %v554 = vld [vmem:[%s329 + $0x20] sm:$0xf]
      %v555 = vld [vmem:[%s329 + $0x24] sm:$0xf]
      %v556 = vld [vmem:[%s329 + $0x28] sm:$0xf]
      %v557 = vld [vmem:[%s329 + $0x2c] sm:$0xf]
      %v558 = vld [vmem:[%s329 + $0x30] sm:$0xf]
      %v559 = vld [vmem:[%s329 + $0x34] sm:$0xf]
      %v560 = vld [vmem:[%s329 + $0x38] sm:$0xf]
      %v561 = vld [vmem:[%s329 + $0x3c] sm:$0xf]
      %v562 = vld [vmem:[%s329 + $0x40] sm:$0xf]
      %v563 = vld [vmem:[%s329 + $0x44] sm:$0xf]
      %v564 = vld [vmem:[%s329 + $0x48] sm:$0xf]
      %v565 = vld [vmem:[%s329 + $0x4c] sm:$0xf]
      %v566 = vld [vmem:[%s329 + $0x50] sm:$0xf]
      %v567 = vld [vmem:[%s329 + $0x54] sm:$0xf]
      %v568 = vld [vmem:[%s329 + $0x58] sm:$0xf]
      %v569 = vld [vmem:[%s329 + $0x5c] sm:$0xf]
      %v570 = vld [vmem:[%s329 + $0x60] sm:$0xf]
      %v571 = vld [vmem:[%s329 + $0x64] sm:$0xf]
      %v572 = vld [vmem:[%s329 + $0x68] sm:$0xf]
      %v573 = vld [vmem:[%s329 + $0x6c] sm:$0xf]
      %v574 = vld [vmem:[%s329 + $0x70] sm:$0xf]
      %v575 = vld [vmem:[%s329 + $0x74] sm:$0xf]
      %v576 = vld [vmem:[%s329 + $0x78] sm:$0xf]
      %v577 = vld [vmem:[%s329 + $0x7c] sm:$0xf]
      %v642 = vunpack.c.l.b16 %v482
      %v643 = vunpack.c.h.b16 %v482
      %v644 = vunpack.c.l.b16 %v483
      %v645 = vunpack.c.h.b16 %v483
      %v646 = vunpack.c.l.b16 %v484
      %v647 = vunpack.c.h.b16 %v484
      %v648 = vunpack.c.l.b16 %v485
      %v649 = vunpack.c.h.b16 %v485
      %v650 = vunpack.c.l.b16 %v486
      %v651 = vunpack.c.h.b16 %v486
      %v652 = vunpack.c.l.b16 %v487
      %v653 = vunpack.c.h.b16 %v487
      %v654 = vunpack.c.l.b16 %v488
      %v655 = vunpack.c.h.b16 %v488
      %v656 = vunpack.c.l.b16 %v489
      %v657 = vunpack.c.h.b16 %v489
      %v658 = vunpack.c.l.b16 %v490
      %v659 = vunpack.c.h.b16 %v490
      %v660 = vunpack.c.l.b16 %v491
      %v661 = vunpack.c.h.b16 %v491
      %v662 = vunpack.c.l.b16 %v492
      %v663 = vunpack.c.h.b16 %v492
      %v664 = vunpack.c.l.b16 %v493
      %v665 = vunpack.c.h.b16 %v493
      %v666 = vunpack.c.l.b16 %v494
      %v667 = vunpack.c.h.b16 %v494
      %v668 = vunpack.c.l.b16 %v495
      %v669 = vunpack.c.h.b16 %v495
      %v670 = vunpack.c.l.b16 %v496
      %v671 = vunpack.c.h.b16 %v496
      %v672 = vunpack.c.l.b16 %v497
      %v673 = vunpack.c.h.b16 %v497
      %v674 = vunpack.c.l.b16 %v498
      %v675 = vunpack.c.h.b16 %v498
      %v676 = vunpack.c.l.b16 %v499
      %v677 = vunpack.c.h.b16 %v499
      %v678 = vunpack.c.l.b16 %v500
      %v679 = vunpack.c.h.b16 %v500
      %v680 = vunpack.c.l.b16 %v501
      %v681 = vunpack.c.h.b16 %v501
      %v682 = vunpack.c.l.b16 %v502
      %v683 = vunpack.c.h.b16 %v502
      %v684 = vunpack.c.l.b16 %v503
      %v685 = vunpack.c.h.b16 %v503
      %v686 = vunpack.c.l.b16 %v504
      %v687 = vunpack.c.h.b16 %v504
      %v688 = vunpack.c.l.b16 %v505
      %v689 = vunpack.c.h.b16 %v505
      %v690 = vunpack.c.l.b16 %v506
      %v691 = vunpack.c.h.b16 %v506
      %v692 = vunpack.c.l.b16 %v507
      %v693 = vunpack.c.h.b16 %v507
      %v694 = vunpack.c.l.b16 %v508
      %v695 = vunpack.c.h.b16 %v508
      %v696 = vunpack.c.l.b16 %v509
      %v697 = vunpack.c.h.b16 %v509
      %v698 = vunpack.c.l.b16 %v510
      %v699 = vunpack.c.h.b16 %v510
      %v700 = vunpack.c.l.b16 %v511
      %v701 = vunpack.c.h.b16 %v511
      %v702 = vunpack.c.l.b16 %v512
      %v703 = vunpack.c.h.b16 %v512
      %v704 = vunpack.c.l.b16 %v513
      %v705 = vunpack.c.h.b16 %v513
      %v706 = vunpack.c.l.b16 %v514
      %v707 = vunpack.c.h.b16 %v514
      %v708 = vunpack.c.l.b16 %v515
      %v709 = vunpack.c.h.b16 %v515
      %v710 = vunpack.c.l.b16 %v516
      %v711 = vunpack.c.h.b16 %v516
      %v712 = vunpack.c.l.b16 %v517
      %v713 = vunpack.c.h.b16 %v517
      %v714 = vunpack.c.l.b16 %v518
      %v715 = vunpack.c.h.b16 %v518
      %v716 = vunpack.c.l.b16 %v519
      %v717 = vunpack.c.h.b16 %v519
      %v718 = vunpack.c.l.b16 %v520
      %v719 = vunpack.c.h.b16 %v520
      %v720 = vunpack.c.l.b16 %v521
      %v721 = vunpack.c.h.b16 %v521
      %v722 = vunpack.c.l.b16 %v522
      %v723 = vunpack.c.h.b16 %v522
      %v724 = vunpack.c.l.b16 %v523
      %v725 = vunpack.c.h.b16 %v523
      %v726 = vunpack.c.l.b16 %v524
      %v727 = vunpack.c.h.b16 %v524
      %v728 = vunpack.c.l.b16 %v525
      %v729 = vunpack.c.h.b16 %v525
      %v730 = vunpack.c.l.b16 %v526
      %v731 = vunpack.c.h.b16 %v526
      %v732 = vunpack.c.l.b16 %v527
      %v733 = vunpack.c.h.b16 %v527
      %v734 = vunpack.c.l.b16 %v528
      %v735 = vunpack.c.h.b16 %v528
      %v736 = vunpack.c.l.b16 %v529
      %v737 = vunpack.c.h.b16 %v529
      %v738 = vunpack.c.l.b16 %v530
      %v739 = vunpack.c.h.b16 %v530
      %v740 = vunpack.c.l.b16 %v531
      %v741 = vunpack.c.h.b16 %v531
      %v742 = vunpack.c.l.b16 %v532
      %v743 = vunpack.c.h.b16 %v532
      %v744 = vunpack.c.l.b16 %v533
      %v745 = vunpack.c.h.b16 %v533
      %v746 = vunpack.c.l.b16 %v534
      %v747 = vunpack.c.h.b16 %v534
      %v748 = vunpack.c.l.b16 %v535
      %v749 = vunpack.c.h.b16 %v535
      %v750 = vunpack.c.l.b16 %v536
      %v751 = vunpack.c.h.b16 %v536
      %v752 = vunpack.c.l.b16 %v537
      %v753 = vunpack.c.h.b16 %v537
      %v754 = vunpack.c.l.b16 %v538
      %v755 = vunpack.c.h.b16 %v538
      %v756 = vunpack.c.l.b16 %v539
      %v757 = vunpack.c.h.b16 %v539
      %v758 = vunpack.c.l.b16 %v540
      %v759 = vunpack.c.h.b16 %v540
      %v760 = vunpack.c.l.b16 %v541
      %v761 = vunpack.c.h.b16 %v541
      %v762 = vunpack.c.l.b16 %v542
      %v763 = vunpack.c.h.b16 %v542
      %v764 = vunpack.c.l.b16 %v543
      %v765 = vunpack.c.h.b16 %v543
      %v766 = vunpack.c.l.b16 %v544
      %v767 = vunpack.c.h.b16 %v544
      %v768 = vunpack.c.l.b16 %v545
      %v769 = vunpack.c.h.b16 %v545
      %v770 = vpack.c.b16 %v644, %v642
      %v771 = vpack.c.b16 %v645, %v643
      %v772 = vpack.c.b16 %v648, %v646
      %v773 = vpack.c.b16 %v649, %v647
      %v774 = vpack.c.b16 %v652, %v650
      %v775 = vpack.c.b16 %v653, %v651
      %v776 = vpack.c.b16 %v656, %v654
      %v777 = vpack.c.b16 %v657, %v655
      %v778 = vpack.c.b16 %v660, %v658
      %v779 = vpack.c.b16 %v661, %v659
      %v780 = vpack.c.b16 %v664, %v662
      %v781 = vpack.c.b16 %v665, %v663
      %v782 = vpack.c.b16 %v668, %v666
      %v783 = vpack.c.b16 %v669, %v667
      %v784 = vpack.c.b16 %v672, %v670
      %v785 = vpack.c.b16 %v673, %v671
      %v786 = vpack.c.b16 %v676, %v674
      %v787 = vpack.c.b16 %v677, %v675
      %v788 = vpack.c.b16 %v680, %v678
      %v789 = vpack.c.b16 %v681, %v679
      %v790 = vpack.c.b16 %v684, %v682
      %v791 = vpack.c.b16 %v685, %v683
      %v792 = vpack.c.b16 %v688, %v686
      %v793 = vpack.c.b16 %v689, %v687
      %v794 = vpack.c.b16 %v692, %v690
      %v795 = vpack.c.b16 %v693, %v691
      %v796 = vpack.c.b16 %v696, %v694
      %v797 = vpack.c.b16 %v697, %v695
      %v798 = vpack.c.b16 %v700, %v698
      %v799 = vpack.c.b16 %v701, %v699
      %v800 = vpack.c.b16 %v704, %v702
      %v801 = vpack.c.b16 %v705, %v703
      %v802 = vpack.c.b16 %v708, %v706
      %v803 = vpack.c.b16 %v709, %v707
      %v804 = vpack.c.b16 %v712, %v710
      %v805 = vpack.c.b16 %v713, %v711
      %v806 = vpack.c.b16 %v716, %v714
      %v807 = vpack.c.b16 %v717, %v715
      %v808 = vpack.c.b16 %v720, %v718
      %v809 = vpack.c.b16 %v721, %v719
      %v810 = vpack.c.b16 %v724, %v722
      %v811 = vpack.c.b16 %v725, %v723
      %v812 = vpack.c.b16 %v728, %v726
      %v813 = vpack.c.b16 %v729, %v727
      %v814 = vpack.c.b16 %v732, %v730
      %v815 = vpack.c.b16 %v733, %v731
      %v816 = vpack.c.b16 %v736, %v734
      %v817 = vpack.c.b16 %v737, %v735
      %v818 = vpack.c.b16 %v740, %v738
      %v819 = vpack.c.b16 %v741, %v739
      %v820 = vpack.c.b16 %v744, %v742
      %v821 = vpack.c.b16 %v745, %v743
      %v822 = vpack.c.b16 %v748, %v746
      %v823 = vpack.c.b16 %v749, %v747
      %v824 = vpack.c.b16 %v752, %v750
      %v825 = vpack.c.b16 %v753, %v751
      %v826 = vpack.c.b16 %v756, %v754
      %v827 = vpack.c.b16 %v757, %v755
      %v828 = vpack.c.b16 %v760, %v758
      %v829 = vpack.c.b16 %v761, %v759
      %v830 = vpack.c.b16 %v764, %v762
      %v831 = vpack.c.b16 %v765, %v763
      %v832 = vpack.c.b16 %v768, %v766
      %v833 = vpack.c.b16 %v769, %v767
      %v930 = vunpack.c.l.b16 %v546
      %v931 = vunpack.c.l.b16 %v547
      %v932 = vunpack.c.l.b16 %v548
      %v933 = vunpack.c.l.b16 %v549
      %v934 = vunpack.c.l.b16 %v550
      %v935 = vunpack.c.l.b16 %v551
      %v936 = vunpack.c.l.b16 %v552
      %v937 = vunpack.c.l.b16 %v553
      %v938 = vunpack.c.l.b16 %v554
      %v939 = vunpack.c.l.b16 %v555
      %v940 = vunpack.c.l.b16 %v556
      %v941 = vunpack.c.l.b16 %v557
      %v942 = vunpack.c.l.b16 %v558
      %v943 = vunpack.c.l.b16 %v559
      %v944 = vunpack.c.l.b16 %v560
      %v945 = vunpack.c.l.b16 %v561
      %v946 = vunpack.c.l.b16 %v562
      %v947 = vunpack.c.l.b16 %v563
      %v948 = vunpack.c.l.b16 %v564
      %v949 = vunpack.c.l.b16 %v565
      %v950 = vunpack.c.l.b16 %v566
      %v951 = vunpack.c.l.b16 %v567
      %v952 = vunpack.c.l.b16 %v568
      %v953 = vunpack.c.l.b16 %v569
      %v954 = vunpack.c.l.b16 %v570
      %v955 = vunpack.c.l.b16 %v571
      %v956 = vunpack.c.l.b16 %v572
      %v957 = vunpack.c.l.b16 %v573
      %v958 = vunpack.c.l.b16 %v574
      %v959 = vunpack.c.l.b16 %v575
      %v960 = vunpack.c.l.b16 %v576
      %v961 = vunpack.c.l.b16 %v577
      %v962 = vpack.c.b16 %v931, %v930
      %v963 = vpack.c.b16 %v933, %v932
      %v964 = vpack.c.b16 %v935, %v934
      %v965 = vpack.c.b16 %v937, %v936
      %v966 = vpack.c.b16 %v939, %v938
      %v967 = vpack.c.b16 %v941, %v940
      %v968 = vpack.c.b16 %v943, %v942
      %v969 = vpack.c.b16 %v945, %v944
      %v970 = vpack.c.b16 %v947, %v946
      %v971 = vpack.c.b16 %v949, %v948
      %v972 = vpack.c.b16 %v951, %v950
      %v973 = vpack.c.b16 %v953, %v952
      %v974 = vpack.c.b16 %v955, %v954
      %v975 = vpack.c.b16 %v957, %v956
      %v976 = vpack.c.b16 %v959, %v958
      %v977 = vpack.c.b16 %v961, %v960
      %994 = vmatprep.subr.bf16.mxu0 0
      %995 = vmatpush1.bf16.msra.mxu0 %v962
      %996 = vmatprep.subr.bf16.mxu0 0
      %997 = vmatpush1.bf16.msra.mxu0 %v963
      %998 = vmatprep.subr.bf16.mxu0 0
      %999 = vmatpush1.bf16.msra.mxu0 %v964
      %1000 = vmatprep.subr.bf16.mxu0 0
      %1001 = vmatpush1.bf16.msra.mxu0 %v965
      %1002 = vmatprep.subr.bf16.mxu0 0
      %1003 = vmatpush1.bf16.msra.mxu0 %v966
      %1004 = vmatprep.subr.bf16.mxu0 0
      %1005 = vmatpush1.bf16.msra.mxu0 %v967
      %1006 = vmatprep.subr.bf16.mxu0 0
      %1007 = vmatpush1.bf16.msra.mxu0 %v968
      %1008 = vmatprep.subr.bf16.mxu0 0
      %1009 = vmatpush1.bf16.msra.mxu0 %v969
      %1010 = vmatprep.subr.bf16.mxu0 0
      %1011 = vmatpush1.bf16.msra.mxu0 %v970
      %1012 = vmatprep.subr.bf16.mxu0 0
      %1013 = vmatpush1.bf16.msra.mxu0 %v971
      %1014 = vmatprep.subr.bf16.mxu0 0
      %1015 = vmatpush1.bf16.msra.mxu0 %v972
      %1016 = vmatprep.subr.bf16.mxu0 0
      %1017 = vmatpush1.bf16.msra.mxu0 %v973
      %1018 = vmatprep.subr.bf16.mxu0 0
      %1019 = vmatpush1.bf16.msra.mxu0 %v974
      %1020 = vmatprep.subr.bf16.mxu0 0
      %1021 = vmatpush1.bf16.msra.mxu0 %v975
      %1022 = vmatprep.subr.bf16.mxu0 0
      %1023 = vmatpush1.bf16.msra.mxu0 %v976
      %1024 = vmatprep.subr.bf16.mxu0 0
      %1025 = vmatpush1.bf16.msra.mxu0 %v977
      %1026 = vmatprep.mubr.bf16.mxu0 %v771
      %1027 = vmatmul.mubr.bf16.gmra.mrb[0].mxu0 %v770
      %v1028 = vpop.f32.mrb[0].mxu0
      %v1029 = vadd.f32 0.0, %v1028
      %v1030 = vpop.f32.mrb[0].mxu0
      %v1031 = vpop.f32.mrb[0].mxu0
      %v1032 = vadd.f32 0.0, %v1031
      %v1033 = vpop.f32.mrb[0].mxu0
      %1034 = vmatprep.mubr.bf16.mxu0 %v773
      %1035 = vmatmul.mubr.bf16.gmra.mrb[0].mxu0 %v772
      %v1036 = vpop.f32.mrb[0].mxu0
      %v1037 = vadd.f32 0.0, %v1036
      %v1038 = vpop.f32.mrb[0].mxu0
      %v1039 = vpop.f32.mrb[0].mxu0
      %v1040 = vadd.f32 0.0, %v1039
      %v1041 = vpop.f32.mrb[0].mxu0
      %1042 = vmatprep.mubr.bf16.mxu0 %v775
      %1043 = vmatmul.mubr.bf16.gmra.mrb[0].mxu0 %v774
      %v1044 = vpop.f32.mrb[0].mxu0
      %v1045 = vadd.f32 0.0, %v1044
      %v1046 = vpop.f32.mrb[0].mxu0
      %v1047 = vpop.f32.mrb[0].mxu0
      %v1048 = vadd.f32 0.0, %v1047
      %v1049 = vpop.f32.mrb[0].mxu0
      %1050 = vmatprep.mubr.bf16.mxu0 %v777
      %1051 = vmatmul.mubr.bf16.gmra.mrb[0].mxu0 %v776
      %v1052 = vpop.f32.mrb[0].mxu0
      %v1053 = vadd.f32 0.0, %v1052
      %v1054 = vpop.f32.mrb[0].mxu0
      %v1055 = vpop.f32.mrb[0].mxu0
      %v1056 = vadd.f32 0.0, %v1055
      %v1057 = vpop.f32.mrb[0].mxu0
      %1058 = vmatprep.mubr.bf16.mxu0 %v779
      %1059 = vmatmul.mubr.bf16.gmra.mrb[0].mxu0 %v778
      %v1060 = vpop.f32.mrb[0].mxu0
      %v1061 = vadd.f32 0.0, %v1060
      %v1062 = vpop.f32.mrb[0].mxu0
      %v1063 = vpop.f32.mrb[0].mxu0
      %v1064 = vadd.f32 0.0, %v1063
      %v1065 = vpop.f32.mrb[0].mxu0
      %1066 = vmatprep.mubr.bf16.mxu0 %v781
      %1067 = vmatmul.mubr.bf16.gmra.mrb[0].mxu0 %v780
      %v1068 = vpop.f32.mrb[0].mxu0
      %v1069 = vadd.f32 0.0, %v1068
      %v1070 = vpop.f32.mrb[0].mxu0
      %v1071 = vpop.f32.mrb[0].mxu0
      %v1072 = vadd.f32 0.0, %v1071
      %v1073 = vpop.f32.mrb[0].mxu0
      %1074 = vmatprep.mubr.bf16.mxu0 %v783
      %1075 = vmatmul.mubr.bf16.gmra.mrb[0].mxu0 %v782
      %v1076 = vpop.f32.mrb[0].mxu0
      %v1077 = vadd.f32 0.0, %v1076
      %v1078 = vpop.f32.mrb[0].mxu0
      %v1079 = vpop.f32.mrb[0].mxu0
      %v1080 = vadd.f32 0.0, %v1079
      %v1081 = vpop.f32.mrb[0].mxu0
      %1082 = vmatprep.mubr.bf16.mxu0 %v785
      %1083 = vmatmul.mubr.bf16.gmra.mrb[0].mxu0 %v784
      %v1084 = vpop.f32.mrb[0].mxu0
      %v1085 = vadd.f32 0.0, %v1084
      %v1086 = vpop.f32.mrb[0].mxu0
      %v1087 = vpop.f32.mrb[0].mxu0
      %v1088 = vadd.f32 0.0, %v1087
      %v1089 = vpop.f32.mrb[0].mxu0
      %1090 = vmatprep.mubr.bf16.mxu0 %v787
      %1091 = vmatmul.mubr.bf16.gmra.mrb[0].mxu0 %v786
      %v1092 = vpop.f32.mrb[0].mxu0
      %v1093 = vadd.f32 0.0, %v1092
      %v1094 = vpop.f32.mrb[0].mxu0
      %v1095 = vpop.f32.mrb[0].mxu0
      %v1096 = vadd.f32 0.0, %v1095
      %v1097 = vpop.f32.mrb[0].mxu0
      %1098 = vmatprep.mubr.bf16.mxu0 %v789
      %1099 = vmatmul.mubr.bf16.gmra.mrb[0].mxu0 %v788
      %v1100 = vpop.f32.mrb[0].mxu0
      %v1101 = vadd.f32 0.0, %v1100
      %v1102 = vpop.f32.mrb[0].mxu0
      %v1103 = vpop.f32.mrb[0].mxu0
      %v1104 = vadd.f32 0.0, %v1103
      %v1105 = vpop.f32.mrb[0].mxu0
      %1106 = vmatprep.mubr.bf16.mxu0 %v791
      %1107 = vmatmul.mubr.bf16.gmra.mrb[0].mxu0 %v790
      %v1108 = vpop.f32.mrb[0].mxu0
      %v1109 = vadd.f32 0.0, %v1108
      %v1110 = vpop.f32.mrb[0].mxu0
      %v1111 = vpop.f32.mrb[0].mxu0
      %v1112 = vadd.f32 0.0, %v1111
      %v1113 = vpop.f32.mrb[0].mxu0
      %1114 = vmatprep.mubr.bf16.mxu0 %v793
      %1115 = vmatmul.mubr.bf16.gmra.mrb[0].mxu0 %v792
      %v1116 = vpop.f32.mrb[0].mxu0
      %v1117 = vadd.f32 0.0, %v1116
      %v1118 = vpop.f32.mrb[0].mxu0
      %v1119 = vpop.f32.mrb[0].mxu0
      %v1120 = vadd.f32 0.0, %v1119
      %v1121 = vpop.f32.mrb[0].mxu0
      %1122 = vmatprep.mubr.bf16.mxu0 %v795
      %1123 = vmatmul.mubr.bf16.gmra.mrb[0].mxu0 %v794
      %v1124 = vpop.f32.mrb[0].mxu0
      %v1125 = vadd.f32 0.0, %v1124
      %v1126 = vpop.f32.mrb[0].mxu0
      %v1127 = vpop.f32.mrb[0].mxu0
      %v1128 = vadd.f32 0.0, %v1127
      %v1129 = vpop.f32.mrb[0].mxu0
      %1130 = vmatprep.mubr.bf16.mxu0 %v797
      %1131 = vmatmul.mubr.bf16.gmra.mrb[0].mxu0 %v796
      %v1132 = vpop.f32.mrb[0].mxu0
      %v1133 = vadd.f32 0.0, %v1132
      %v1134 = vpop.f32.mrb[0].mxu0
      %v1135 = vpop.f32.mrb[0].mxu0
      %v1136 = vadd.f32 0.0, %v1135
      %v1137 = vpop.f32.mrb[0].mxu0
      %1138 = vmatprep.mubr.bf16.mxu0 %v799
      %1139 = vmatmul.mubr.bf16.gmra.mrb[0].mxu0 %v798
      %v1140 = vpop.f32.mrb[0].mxu0
      %v1141 = vadd.f32 0.0, %v1140
      %v1142 = vpop.f32.mrb[0].mxu0
      %v1143 = vpop.f32.mrb[0].mxu0
      %v1144 = vadd.f32 0.0, %v1143
      %v1145 = vpop.f32.mrb[0].mxu0
      %1146 = vmatprep.mubr.bf16.mxu0 %v801
      %1147 = vmatmul.mubr.bf16.gmra.mrb[0].mxu0 %v800
      %v1148 = vpop.f32.mrb[0].mxu0
      %v1149 = vadd.f32 0.0, %v1148
      %v1150 = vpop.f32.mrb[0].mxu0
      %v1151 = vpop.f32.mrb[0].mxu0
      %v1152 = vadd.f32 0.0, %v1151
      %v1153 = vpop.f32.mrb[0].mxu0
      %1154 = vmatprep.mubr.bf16.mxu0 %v803
      %1155 = vmatmul.mubr.bf16.gmra.mrb[0].mxu0 %v802
      %v1156 = vpop.f32.mrb[0].mxu0
      %v1157 = vadd.f32 0.0, %v1156
      %v1158 = vpop.f32.mrb[0].mxu0
      %v1159 = vpop.f32.mrb[0].mxu0
      %v1160 = vadd.f32 0.0, %v1159
      %v1161 = vpop.f32.mrb[0].mxu0
      %1162 = vmatprep.mubr.bf16.mxu0 %v805
      %1163 = vmatmul.mubr.bf16.gmra.mrb[0].mxu0 %v804
      %v1164 = vpop.f32.mrb[0].mxu0
      %v1165 = vadd.f32 0.0, %v1164
      %v1166 = vpop.f32.mrb[0].mxu0
      %v1167 = vpop.f32.mrb[0].mxu0
      %v1168 = vadd.f32 0.0, %v1167
      %v1169 = vpop.f32.mrb[0].mxu0
      %1170 = vmatprep.mubr.bf16.mxu0 %v807
      %1171 = vmatmul.mubr.bf16.gmra.mrb[0].mxu0 %v806
      %v1172 = vpop.f32.mrb[0].mxu0
      %v1173 = vadd.f32 0.0, %v1172
      %v1174 = vpop.f32.mrb[0].mxu0
      %v1175 = vpop.f32.mrb[0].mxu0
      %v1176 = vadd.f32 0.0, %v1175
      %v1177 = vpop.f32.mrb[0].mxu0
      %1178 = vmatprep.mubr.bf16.mxu0 %v809
      %1179 = vmatmul.mubr.bf16.gmra.mrb[0].mxu0 %v808
      %v1180 = vpop.f32.mrb[0].mxu0
      %v1181 = vadd.f32 0.0, %v1180
      %v1182 = vpop.f32.mrb[0].mxu0
      %v1183 = vpop.f32.mrb[0].mxu0
      %v1184 = vadd.f32 0.0, %v1183
      %v1185 = vpop.f32.mrb[0].mxu0
      %1186 = vmatprep.mubr.bf16.mxu0 %v811
      %1187 = vmatmul.mubr.bf16.gmra.mrb[0].mxu0 %v810
      %v1188 = vpop.f32.mrb[0].mxu0
      %v1189 = vadd.f32 0.0, %v1188
      %v1190 = vpop.f32.mrb[0].mxu0
      %v1191 = vpop.f32.mrb[0].mxu0
      %v1192 = vadd.f32 0.0, %v1191
      %v1193 = vpop.f32.mrb[0].mxu0
      %1194 = vmatprep.mubr.bf16.mxu0 %v813
      %1195 = vmatmul.mubr.bf16.gmra.mrb[0].mxu0 %v812
      %v1196 = vpop.f32.mrb[0].mxu0
      %v1197 = vadd.f32 0.0, %v1196
      %v1198 = vpop.f32.mrb[0].mxu0
      %v1199 = vpop.f32.mrb[0].mxu0
      %v1200 = vadd.f32 0.0, %v1199
      %v1201 = vpop.f32.mrb[0].mxu0
      %1202 = vmatprep.mubr.bf16.mxu0 %v815
      %1203 = vmatmul.mubr.bf16.gmra.mrb[0].mxu0 %v814
      %v1204 = vpop.f32.mrb[0].mxu0
      %v1205 = vadd.f32 0.0, %v1204
      %v1206 = vpop.f32.mrb[0].mxu0
      %v1207 = vpop.f32.mrb[0].mxu0
      %v1208 = vadd.f32 0.0, %v1207
      %v1209 = vpop.f32.mrb[0].mxu0
      %1210 = vmatprep.mubr.bf16.mxu0 %v817
      %1211 = vmatmul.mubr.bf16.gmra.mrb[0].mxu0 %v816
      %v1212 = vpop.f32.mrb[0].mxu0
      %v1213 = vadd.f32 0.0, %v1212
      %v1214 = vpop.f32.mrb[0].mxu0
      %v1215 = vpop.f32.mrb[0].mxu0
      %v1216 = vadd.f32 0.0, %v1215
      %v1217 = vpop.f32.mrb[0].mxu0
      %1218 = vmatprep.mubr.bf16.mxu0 %v819
      %1219 = vmatmul.mubr.bf16.gmra.mrb[0].mxu0 %v818
      %v1220 = vpop.f32.mrb[0].mxu0
      %v1221 = vadd.f32 0.0, %v1220
      %v1222 = vpop.f32.mrb[0].mxu0
      %v1223 = vpop.f32.mrb[0].mxu0
      %v1224 = vadd.f32 0.0, %v1223
      %v1225 = vpop.f32.mrb[0].mxu0
      %1226 = vmatprep.mubr.bf16.mxu0 %v821
      %1227 = vmatmul.mubr.bf16.gmra.mrb[0].mxu0 %v820
      %v1228 = vpop.f32.mrb[0].mxu0
      %v1229 = vadd.f32 0.0, %v1228
      %v1230 = vpop.f32.mrb[0].mxu0
      %v1231 = vpop.f32.mrb[0].mxu0
      %v1232 = vadd.f32 0.0, %v1231
      %v1233 = vpop.f32.mrb[0].mxu0
      %1234 = vmatprep.mubr.bf16.mxu0 %v823
      %1235 = vmatmul.mubr.bf16.gmra.mrb[0].mxu0 %v822
      %v1236 = vpop.f32.mrb[0].mxu0
      %v1237 = vadd.f32 0.0, %v1236
      %v1238 = vpop.f32.mrb[0].mxu0
      %v1239 = vpop.f32.mrb[0].mxu0
      %v1240 = vadd.f32 0.0, %v1239
      %v1241 = vpop.f32.mrb[0].mxu0
      %1242 = vmatprep.mubr.bf16.mxu0 %v825
      %1243 = vmatmul.mubr.bf16.gmra.mrb[0].mxu0 %v824
      %v1244 = vpop.f32.mrb[0].mxu0
      %v1245 = vadd.f32 0.0, %v1244
      %v1246 = vpop.f32.mrb[0].mxu0
      %v1247 = vpop.f32.mrb[0].mxu0
      %v1248 = vadd.f32 0.0, %v1247
      %v1249 = vpop.f32.mrb[0].mxu0
      %1250 = vmatprep.mubr.bf16.mxu0 %v827
      %1251 = vmatmul.mubr.bf16.gmra.mrb[0].mxu0 %v826
      %v1252 = vpop.f32.mrb[0].mxu0
      %v1253 = vadd.f32 0.0, %v1252
      %v1254 = vpop.f32.mrb[0].mxu0
      %v1255 = vpop.f32.mrb[0].mxu0
      %v1256 = vadd.f32 0.0, %v1255
      %v1257 = vpop.f32.mrb[0].mxu0
      %1258 = vmatprep.mubr.bf16.mxu0 %v829
      %1259 = vmatmul.mubr.bf16.gmra.mrb[0].mxu0 %v828
      %v1260 = vpop.f32.mrb[0].mxu0
      %v1261 = vadd.f32 0.0, %v1260
      %v1262 = vpop.f32.mrb[0].mxu0
      %v1263 = vpop.f32.mrb[0].mxu0
      %v1264 = vadd.f32 0.0, %v1263
      %v1265 = vpop.f32.mrb[0].mxu0
      %1266 = vmatprep.mubr.bf16.mxu0 %v831
      %1267 = vmatmul.mubr.bf16.gmra.mrb[0].mxu0 %v830
      %v1268 = vpop.f32.mrb[0].mxu0
      %v1269 = vadd.f32 0.0, %v1268
      %v1270 = vpop.f32.mrb[0].mxu0
      %v1271 = vpop.f32.mrb[0].mxu0
      %v1272 = vadd.f32 0.0, %v1271
      %v1273 = vpop.f32.mrb[0].mxu0
      %1274 = vmatprep.mubr.bf16.mxu0 %v833
      %1275 = vmatmul.mubr.bf16.gmra.mrb[0].mxu0 %v832
      %v1276 = vpop.f32.mrb[0].mxu0
      %v1277 = vadd.f32 0.0, %v1276
      %v1278 = vpop.f32.mrb[0].mxu0
      %v1279 = vpop.f32.mrb[0].mxu0
      %v1280 = vadd.f32 0.0, %v1279
      %v1281 = vpop.f32.mrb[0].mxu0
      %1282 = vdwg.mxu0
      %v1283 = vadd.f32 %v418, %v1029
      %v1284 = vadd.f32 %v419, %v1032
      %v1285 = vadd.f32 %v420, %v1037
      %v1286 = vadd.f32 %v421, %v1040
      %v1287 = vadd.f32 %v422, %v1045
      %v1288 = vadd.f32 %v423, %v1048
      %v1289 = vadd.f32 %v424, %v1053
      %v1290 = vadd.f32 %v425, %v1056
      %v1291 = vadd.f32 %v426, %v1061
      %v1292 = vadd.f32 %v427, %v1064
      %v1293 = vadd.f32 %v428, %v1069
      %v1294 = vadd.f32 %v429, %v1072
      %v1295 = vadd.f32 %v430, %v1077
      %v1296 = vadd.f32 %v431, %v1080
      %v1297 = vadd.f32 %v432, %v1085
      %v1298 = vadd.f32 %v433, %v1088
      %v1299 = vadd.f32 %v434, %v1093
      %v1300 = vadd.f32 %v435, %v1096
      %v1301 = vadd.f32 %v436, %v1101
      %v1302 = vadd.f32 %v437, %v1104
      %v1303 = vadd.f32 %v438, %v1109
      %v1304 = vadd.f32 %v439, %v1112
      %v1305 = vadd.f32 %v440, %v1117
      %v1306 = vadd.f32 %v441, %v1120
      %v1307 = vadd.f32 %v442, %v1125
      %v1308 = vadd.f32 %v443, %v1128
      %v1309 = vadd.f32 %v444, %v1133
      %v1310 = vadd.f32 %v445, %v1136
      %v1311 = vadd.f32 %v446, %v1141
      %v1312 = vadd.f32 %v447, %v1144
      %v1313 = vadd.f32 %v448, %v1149
      %v1314 = vadd.f32 %v449, %v1152
      %v1315 = vadd.f32 %v450, %v1157
      %v1316 = vadd.f32 %v451, %v1160
      %v1317 = vadd.f32 %v452, %v1165
      %v1318 = vadd.f32 %v453, %v1168
      %v1319 = vadd.f32 %v454, %v1173
      %v1320 = vadd.f32 %v455, %v1176
      %v1321 = vadd.f32 %v456, %v1181
      %v1322 = vadd.f32 %v457, %v1184
      %v1323 = vadd.f32 %v458, %v1189
      %v1324 = vadd.f32 %v459, %v1192
      %v1325 = vadd.f32 %v460, %v1197
      %v1326 = vadd.f32 %v461, %v1200
      %v1327 = vadd.f32 %v462, %v1205
      %v1328 = vadd.f32 %v463, %v1208
      %v1329 = vadd.f32 %v464, %v1213
      %v1330 = vadd.f32 %v465, %v1216
      %v1331 = vadd.f32 %v466, %v1221
      %v1332 = vadd.f32 %v467, %v1224
      %v1333 = vadd.f32 %v468, %v1229
      %v1334 = vadd.f32 %v469, %v1232
      %v1335 = vadd.f32 %v470, %v1237
      %v1336 = vadd.f32 %v471, %v1240
      %v1337 = vadd.f32 %v472, %v1245
      %v1338 = vadd.f32 %v473, %v1248
      %v1339 = vadd.f32 %v474, %v1253
      %v1340 = vadd.f32 %v475, %v1256
      %v1341 = vadd.f32 %v476, %v1261
      %v1342 = vadd.f32 %v477, %v1264
      %v1343 = vadd.f32 %v478, %v1269
      %v1344 = vadd.f32 %v479, %v1272
      %v1345 = vadd.f32 %v480, %v1277
      %v1346 = vadd.f32 %v481, %v1280
      %1347 = vst [vmem:[#allocation2] sm:$0xff] %v1283
      %1348 = vst [vmem:[#allocation2 + $0x8] sm:$0xff] %v1284
      %1349 = vst [vmem:[#allocation2 + $0x10] sm:$0xff] %v1285
      %1350 = vst [vmem:[#allocation2 + $0x18] sm:$0xff] %v1286
      %1351 = vst [vmem:[#allocation2 + $0x20] sm:$0xff] %v1287
      %1352 = vst [vmem:[#allocation2 + $0x28] sm:$0xff] %v1288
      %1353 = vst [vmem:[#allocation2 + $0x30] sm:$0xff] %v1289
      %1354 = vst [vmem:[#allocation2 + $0x38] sm:$0xff] %v1290
      %1355 = vst [vmem:[#allocation2 + $0x40] sm:$0xff] %v1291
      %1356 = vst [vmem:[#allocation2 + $0x48] sm:$0xff] %v1292
      %1357 = vst [vmem:[#allocation2 + $0x50] sm:$0xff] %v1293
      %1358 = vst [vmem:[#allocation2 + $0x58] sm:$0xff] %v1294
      %1359 = vst [vmem:[#allocation2 + $0x60] sm:$0xff] %v1295
      %1360 = vst [vmem:[#allocation2 + $0x68] sm:$0xff] %v1296
      %1361 = vst [vmem:[#allocation2 + $0x70] sm:$0xff] %v1297
      %1362 = vst [vmem:[#allocation2 + $0x78] sm:$0xff] %v1298
      %1363 = vst [vmem:[#allocation2 + $0x80] sm:$0xff] %v1299
      %1364 = vst [vmem:[#allocation2 + $0x88] sm:$0xff] %v1300
      %1365 = vst [vmem:[#allocation2 + $0x90] sm:$0xff] %v1301
      %1366 = vst [vmem:[#allocation2 + $0x98] sm:$0xff] %v1302
      %1367 = vst [vmem:[#allocation2 + $0xa0] sm:$0xff] %v1303
      %1368 = vst [vmem:[#allocation2 + $0xa8] sm:$0xff] %v1304
      %1369 = vst [vmem:[#allocation2 + $0xb0] sm:$0xff] %v1305
      %1370 = vst [vmem:[#allocation2 + $0xb8] sm:$0xff] %v1306
      %1371 = vst [vmem:[#allocation2 + $0xc0] sm:$0xff] %v1307
      %1372 = vst [vmem:[#allocation2 + $0xc8] sm:$0xff] %v1308
      %1373 = vst [vmem:[#allocation2 + $0xd0] sm:$0xff] %v1309
      %1374 = vst [vmem:[#allocation2 + $0xd8] sm:$0xff] %v1310
      %1375 = vst [vmem:[#allocation2 + $0xe0] sm:$0xff] %v1311
      %1376 = vst [vmem:[#allocation2 + $0xe8] sm:$0xff] %v1312
      %1377 = vst [vmem:[#allocation2 + $0xf0] sm:$0xff] %v1313
      %1378 = vst [vmem:[#allocation2 + $0xf8] sm:$0xff] %v1314
      %1379 = vst [vmem:[#allocation2 + $0x100] sm:$0xff] %v1315
      %1380 = vst [vmem:[#allocation2 + $0x108] sm:$0xff] %v1316
      %1381 = vst [vmem:[#allocation2 + $0x110] sm:$0xff] %v1317
      %1382 = vst [vmem:[#allocation2 + $0x118] sm:$0xff] %v1318
      %1383 = vst [vmem:[#allocation2 + $0x120] sm:$0xff] %v1319
      %1384 = vst [vmem:[#allocation2 + $0x128] sm:$0xff] %v1320
      %1385 = vst [vmem:[#allocation2 + $0x130] sm:$0xff] %v1321
      %1386 = vst [vmem:[#allocation2 + $0x138] sm:$0xff] %v1322
      %1387 = vst [vmem:[#allocation2 + $0x140] sm:$0xff] %v1323
      %1388 = vst [vmem:[#allocation2 + $0x148] sm:$0xff] %v1324
      %1389 = vst [vmem:[#allocation2 + $0x150] sm:$0xff] %v1325
      %1390 = vst [vmem:[#allocation2 + $0x158] sm:$0xff] %v1326
      %1391 = vst [vmem:[#allocation2 + $0x160] sm:$0xff] %v1327
      %1392 = vst [vmem:[#allocation2 + $0x168] sm:$0xff] %v1328
      %1393 = vst [vmem:[#allocation2 + $0x170] sm:$0xff] %v1329
      %1394 = vst [vmem:[#allocation2 + $0x178] sm:$0xff] %v1330
      %1395 = vst [vmem:[#allocation2 + $0x180] sm:$0xff] %v1331
      %1396 = vst [vmem:[#allocation2 + $0x188] sm:$0xff] %v1332
      %1397 = vst [vmem:[#allocation2 + $0x190] sm:$0xff] %v1333
      %1398 = vst [vmem:[#allocation2 + $0x198] sm:$0xff] %v1334
      %1399 = vst [vmem:[#allocation2 + $0x1a0] sm:$0xff] %v1335
      %1400 = vst [vmem:[#allocation2 + $0x1a8] sm:$0xff] %v1336
      %1401 = vst [vmem:[#allocation2 + $0x1b0] sm:$0xff] %v1337
      %1402 = vst [vmem:[#allocation2 + $0x1b8] sm:$0xff] %v1338
      %1403 = vst [vmem:[#allocation2 + $0x1c0] sm:$0xff] %v1339
      %1404 = vst [vmem:[#allocation2 + $0x1c8] sm:$0xff] %v1340
      %1405 = vst [vmem:[#allocation2 + $0x1d0] sm:$0xff] %v1341
      %1406 = vst [vmem:[#allocation2 + $0x1d8] sm:$0xff] %v1342
      %1407 = vst [vmem:[#allocation2 + $0x1e0] sm:$0xff] %v1343
      %1408 = vst [vmem:[#allocation2 + $0x1e8] sm:$0xff] %v1344
      %1409 = vst [vmem:[#allocation2 + $0x1f0] sm:$0xff] %v1345
      %1410 = vst [vmem:[#allocation2 + $0x1f8] sm:$0xff] %v1346
      // Predicated region
      $region45: #{pallas_matmul_fused.1} parent=39 // pred_check
        %p1411 = pneg %p350
      $region46: #{pallas_matmul_fused.1} parent=39 // pred_check_branch
        %1413 = sbr.rel (%p1411) target = $region48
      $region47: #{pallas_matmul_fused.1} parent=39 // pred_region
        %v1414 = vld [vmem:[#allocation2] sm:$0xff]
        %v1415 = vld [vmem:[#allocation2 + $0x8] sm:$0xff]
        %v1416 = vld [vmem:[#allocation2 + $0x10] sm:$0xff]
        %v1417 = vld [vmem:[#allocation2 + $0x18] sm:$0xff]
        %v1418 = vld [vmem:[#allocation2 + $0x20] sm:$0xff]
        %v1419 = vld [vmem:[#allocation2 + $0x28] sm:$0xff]
        %v1420 = vld [vmem:[#allocation2 + $0x30] sm:$0xff]
        %v1421 = vld [vmem:[#allocation2 + $0x38] sm:$0xff]
        %v1422 = vld [vmem:[#allocation2 + $0x40] sm:$0xff]
        %v1423 = vld [vmem:[#allocation2 + $0x48] sm:$0xff]
        %v1424 = vld [vmem:[#allocation2 + $0x50] sm:$0xff]
        %v1425 = vld [vmem:[#allocation2 + $0x58] sm:$0xff]
        %v1426 = vld [vmem:[#allocation2 + $0x60] sm:$0xff]
        %v1427 = vld [vmem:[#allocation2 + $0x68] sm:$0xff]
        %v1428 = vld [vmem:[#allocation2 + $0x70] sm:$0xff]
        %v1429 = vld [vmem:[#allocation2 + $0x78] sm:$0xff]
        %v1430 = vld [vmem:[#allocation2 + $0x80] sm:$0xff]
        %v1431 = vld [vmem:[#allocation2 + $0x88] sm:$0xff]
        %v1432 = vld [vmem:[#allocation2 + $0x90] sm:$0xff]
        %v1433 = vld [vmem:[#allocation2 + $0x98] sm:$0xff]
        %v1434 = vld [vmem:[#allocation2 + $0xa0] sm:$0xff]
        %v1435 = vld [vmem:[#allocation2 + $0xa8] sm:$0xff]
        %v1436 = vld [vmem:[#allocation2 + $0xb0] sm:$0xff]
        %v1437 = vld [vmem:[#allocation2 + $0xb8] sm:$0xff]
        %v1438 = vld [vmem:[#allocation2 + $0xc0] sm:$0xff]
        %v1439 = vld [vmem:[#allocation2 + $0xc8] sm:$0xff]
        %v1440 = vld [vmem:[#allocation2 + $0xd0] sm:$0xff]
        %v1441 = vld [vmem:[#allocation2 + $0xd8] sm:$0xff]
        %v1442 = vld [vmem:[#allocation2 + $0xe0] sm:$0xff]
        %v1443 = vld [vmem:[#allocation2 + $0xe8] sm:$0xff]
        %v1444 = vld [vmem:[#allocation2 + $0xf0] sm:$0xff]
        %v1445 = vld [vmem:[#allocation2 + $0xf8] sm:$0xff]
        %v1446 = vld [vmem:[#allocation2 + $0x100] sm:$0xff]
        %v1447 = vld [vmem:[#allocation2 + $0x108] sm:$0xff]
        %v1448 = vld [vmem:[#allocation2 + $0x110] sm:$0xff]
        %v1449 = vld [vmem:[#allocation2 + $0x118] sm:$0xff]
        %v1450 = vld [vmem:[#allocation2 + $0x120] sm:$0xff]
        %v1451 = vld [vmem:[#allocation2 + $0x128] sm:$0xff]
        %v1452 = vld [vmem:[#allocation2 + $0x130] sm:$0xff]
        %v1453 = vld [vmem:[#allocation2 + $0x138] sm:$0xff]
        %v1454 = vld [vmem:[#allocation2 + $0x140] sm:$0xff]
        %v1455 = vld [vmem:[#allocation2 + $0x148] sm:$0xff]
        %v1456 = vld [vmem:[#allocation2 + $0x150] sm:$0xff]
        %v1457 = vld [vmem:[#allocation2 + $0x158] sm:$0xff]
        %v1458 = vld [vmem:[#allocation2 + $0x160] sm:$0xff]
        %v1459 = vld [vmem:[#allocation2 + $0x168] sm:$0xff]
        %v1460 = vld [vmem:[#allocation2 + $0x170] sm:$0xff]
        %v1461 = vld [vmem:[#allocation2 + $0x178] sm:$0xff]
        %v1462 = vld [vmem:[#allocation2 + $0x180] sm:$0xff]
        %v1463 = vld [vmem:[#allocation2 + $0x188] sm:$0xff]
        %v1464 = vld [vmem:[#allocation2 + $0x190] sm:$0xff]
        %v1465 = vld [vmem:[#allocation2 + $0x198] sm:$0xff]
        %v1466 = vld [vmem:[#allocation2 + $0x1a0] sm:$0xff]
        %v1467 = vld [vmem:[#allocation2 + $0x1a8] sm:$0xff]
        %v1468 = vld [vmem:[#allocation2 + $0x1b0] sm:$0xff]
        %v1469 = vld [vmem:[#allocation2 + $0x1b8] sm:$0xff]
        %v1470 = vld [vmem:[#allocation2 + $0x1c0] sm:$0xff]
        %v1471 = vld [vmem:[#allocation2 + $0x1c8] sm:$0xff]
        %v1472 = vld [vmem:[#allocation2 + $0x1d0] sm:$0xff]
        %v1473 = vld [vmem:[#allocation2 + $0x1d8] sm:$0xff]
        %v1474 = vld [vmem:[#allocation2 + $0x1e0] sm:$0xff]
        %v1475 = vld [vmem:[#allocation2 + $0x1e8] sm:$0xff]
        %v1476 = vld [vmem:[#allocation2 + $0x1f0] sm:$0xff]
        %v1477 = vld [vmem:[#allocation2 + $0x1f8] sm:$0xff]
        %v1478 = vld [vmem:[%s333] sm:$0x1]
        %v1480 = vlaneseq
        %v1481 = vshrl.u32 %v1480, 7
        %v1482 = vsub.s32 0, %v1481
        %v1483 = vrot.slane %v1478, %v1482
        %v1485 = vmul.f32 %v1414, %v1483
        %v1486 = vmul.f32 %v1415, %v1483
        %v1487 = vmul.f32 %v1416, %v1483
        %v1488 = vmul.f32 %v1417, %v1483
        %v1489 = vmul.f32 %v1418, %v1483
        %v1490 = vmul.f32 %v1419, %v1483
        %v1491 = vmul.f32 %v1420, %v1483
        %v1492 = vmul.f32 %v1421, %v1483
        %v1493 = vmul.f32 %v1422, %v1483
        %v1494 = vmul.f32 %v1423, %v1483
        %v1495 = vmul.f32 %v1424, %v1483
        %v1496 = vmul.f32 %v1425, %v1483
        %v1497 = vmul.f32 %v1426, %v1483
        %v1498 = vmul.f32 %v1427, %v1483
        %v1499 = vmul.f32 %v1428, %v1483
        %v1500 = vmul.f32 %v1429, %v1483
        %v1501 = vmul.f32 %v1430, %v1483
        %v1502 = vmul.f32 %v1431, %v1483
        %v1503 = vmul.f32 %v1432, %v1483
        %v1504 = vmul.f32 %v1433, %v1483
        %v1505 = vmul.f32 %v1434, %v1483
        %v1506 = vmul.f32 %v1435, %v1483
        %v1507 = vmul.f32 %v1436, %v1483
        %v1508 = vmul.f32 %v1437, %v1483
        %v1509 = vmul.f32 %v1438, %v1483
        %v1510 = vmul.f32 %v1439, %v1483
        %v1511 = vmul.f32 %v1440, %v1483
        %v1512 = vmul.f32 %v1441, %v1483
        %v1513 = vmul.f32 %v1442, %v1483
        %v1514 = vmul.f32 %v1443, %v1483
        %v1515 = vmul.f32 %v1444, %v1483
        %v1516 = vmul.f32 %v1445, %v1483
        %v1517 = vmul.f32 %v1446, %v1483
        %v1518 = vmul.f32 %v1447, %v1483
        %v1519 = vmul.f32 %v1448, %v1483
        %v1520 = vmul.f32 %v1449, %v1483
        %v1521 = vmul.f32 %v1450, %v1483
        %v1522 = vmul.f32 %v1451, %v1483
        %v1523 = vmul.f32 %v1452, %v1483
        %v1524 = vmul.f32 %v1453, %v1483
        %v1525 = vmul.f32 %v1454, %v1483
        %v1526 = vmul.f32 %v1455, %v1483
        %v1527 = vmul.f32 %v1456, %v1483
        %v1528 = vmul.f32 %v1457, %v1483
        %v1529 = vmul.f32 %v1458, %v1483
        %v1530 = vmul.f32 %v1459, %v1483
        %v1531 = vmul.f32 %v1460, %v1483
        %v1532 = vmul.f32 %v1461, %v1483
        %v1533 = vmul.f32 %v1462, %v1483
        %v1534 = vmul.f32 %v1463, %v1483
        %v1535 = vmul.f32 %v1464, %v1483
        %v1536 = vmul.f32 %v1465, %v1483
        %v1537 = vmul.f32 %v1466, %v1483
        %v1538 = vmul.f32 %v1467, %v1483
        %v1539 = vmul.f32 %v1468, %v1483
        %v1540 = vmul.f32 %v1469, %v1483
        %v1541 = vmul.f32 %v1470, %v1483
        %v1542 = vmul.f32 %v1471, %v1483
        %v1543 = vmul.f32 %v1472, %v1483
        %v1544 = vmul.f32 %v1473, %v1483
        %v1545 = vmul.f32 %v1474, %v1483
        %v1546 = vmul.f32 %v1475, %v1483
        %v1547 = vmul.f32 %v1476, %v1483
        %v1548 = vmul.f32 %v1477, %v1483
        %v1549 = vld [vmem:[%s336] sm:$0x1]
        %v1551 = vlaneseq
        %v1552 = vshrl.u32 %v1551, 7
        %v1553 = vsub.s32 0, %v1552
        %v1554 = vrot.slane %v1549, %v1553
        %v1556 = vadd.f32 %v1485, %v1554
        %v1557 = vadd.f32 %v1486, %v1554
        %v1558 = vadd.f32 %v1487, %v1554
        %v1559 = vadd.f32 %v1488, %v1554
        %v1560 = vadd.f32 %v1489, %v1554
        %v1561 = vadd.f32 %v1490, %v1554
        %v1562 = vadd.f32 %v1491, %v1554
        %v1563 = vadd.f32 %v1492, %v1554
        %v1564 = vadd.f32 %v1493, %v1554
        %v1565 = vadd.f32 %v1494, %v1554
        %v1566 = vadd.f32 %v1495, %v1554
        %v1567 = vadd.f32 %v1496, %v1554
        %v1568 = vadd.f32 %v1497, %v1554
        %v1569 = vadd.f32 %v1498, %v1554
        %v1570 = vadd.f32 %v1499, %v1554
        %v1571 = vadd.f32 %v1500, %v1554
        %v1572 = vadd.f32 %v1501, %v1554
        %v1573 = vadd.f32 %v1502, %v1554
        %v1574 = vadd.f32 %v1503, %v1554
        %v1575 = vadd.f32 %v1504, %v1554
        %v1576 = vadd.f32 %v1505, %v1554
        %v1577 = vadd.f32 %v1506, %v1554
        %v1578 = vadd.f32 %v1507, %v1554
        %v1579 = vadd.f32 %v1508, %v1554
        %v1580 = vadd.f32 %v1509, %v1554
        %v1581 = vadd.f32 %v1510, %v1554
        %v1582 = vadd.f32 %v1511, %v1554
        %v1583 = vadd.f32 %v1512, %v1554
        %v1584 = vadd.f32 %v1513, %v1554
        %v1585 = vadd.f32 %v1514, %v1554
        %v1586 = vadd.f32 %v1515, %v1554
        %v1587 = vadd.f32 %v1516, %v1554
        %v1588 = vadd.f32 %v1517, %v1554
        %v1589 = vadd.f32 %v1518, %v1554
        %v1590 = vadd.f32 %v1519, %v1554
        %v1591 = vadd.f32 %v1520, %v1554
        %v1592 = vadd.f32 %v1521, %v1554
        %v1593 = vadd.f32 %v1522, %v1554
        %v1594 = vadd.f32 %v1523, %v1554
        %v1595 = vadd.f32 %v1524, %v1554
        %v1596 = vadd.f32 %v1525, %v1554
        %v1597 = vadd.f32 %v1526, %v1554
        %v1598 = vadd.f32 %v1527, %v1554
        %v1599 = vadd.f32 %v1528, %v1554
        %v1600 = vadd.f32 %v1529, %v1554
        %v1601 = vadd.f32 %v1530, %v1554
        %v1602 = vadd.f32 %v1531, %v1554
        %v1603 = vadd.f32 %v1532, %v1554
        %v1604 = vadd.f32 %v1533, %v1554
        %v1605 = vadd.f32 %v1534, %v1554
        %v1606 = vadd.f32 %v1535, %v1554
        %v1607 = vadd.f32 %v1536, %v1554
        %v1608 = vadd.f32 %v1537, %v1554
        %v1609 = vadd.f32 %v1538, %v1554
        %v1610 = vadd.f32 %v1539, %v1554
        %v1611 = vadd.f32 %v1540, %v1554
        %v1612 = vadd.f32 %v1541, %v1554
        %v1613 = vadd.f32 %v1542, %v1554
        %v1614 = vadd.f32 %v1543, %v1554
        %v1615 = vadd.f32 %v1544, %v1554
        %v1616 = vadd.f32 %v1545, %v1554
        %v1617 = vadd.f32 %v1546, %v1554
        %v1618 = vadd.f32 %v1547, %v1554
        %v1619 = vadd.f32 %v1548, %v1554
        %vm1620 = vcmp.ge.f32.partialorder %v1556, 0.0
        %vm1621 = vcmp.ge.f32.partialorder %v1557, 0.0
        %vm1622 = vcmp.ge.f32.partialorder %v1558, 0.0
        %vm1623 = vcmp.ge.f32.partialorder %v1559, 0.0
        %vm1624 = vcmp.ge.f32.partialorder %v1560, 0.0
        %vm1625 = vcmp.ge.f32.partialorder %v1561, 0.0
        %vm1626 = vcmp.ge.f32.partialorder %v1562, 0.0
        %vm1627 = vcmp.ge.f32.partialorder %v1563, 0.0
        %vm1628 = vcmp.ge.f32.partialorder %v1564, 0.0
        %vm1629 = vcmp.ge.f32.partialorder %v1565, 0.0
        %vm1630 = vcmp.ge.f32.partialorder %v1566, 0.0
        %vm1631 = vcmp.ge.f32.partialorder %v1567, 0.0
        %vm1632 = vcmp.ge.f32.partialorder %v1568, 0.0
        %vm1633 = vcmp.ge.f32.partialorder %v1569, 0.0
        %vm1634 = vcmp.ge.f32.partialorder %v1570, 0.0
        %vm1635 = vcmp.ge.f32.partialorder %v1571, 0.0
        %vm1636 = vcmp.ge.f32.partialorder %v1572, 0.0
        %vm1637 = vcmp.ge.f32.partialorder %v1573, 0.0
        %vm1638 = vcmp.ge.f32.partialorder %v1574, 0.0
        %vm1639 = vcmp.ge.f32.partialorder %v1575, 0.0
        %vm1640 = vcmp.ge.f32.partialorder %v1576, 0.0
        %vm1641 = vcmp.ge.f32.partialorder %v1577, 0.0
        %vm1642 = vcmp.ge.f32.partialorder %v1578, 0.0
        %vm1643 = vcmp.ge.f32.partialorder %v1579, 0.0
        %vm1644 = vcmp.ge.f32.partialorder %v1580, 0.0
        %vm1645 = vcmp.ge.f32.partialorder %v1581, 0.0
        %vm1646 = vcmp.ge.f32.partialorder %v1582, 0.0
        %vm1647 = vcmp.ge.f32.partialorder %v1583, 0.0
        %vm1648 = vcmp.ge.f32.partialorder %v1584, 0.0
        %vm1649 = vcmp.ge.f32.partialorder %v1585, 0.0
        %vm1650 = vcmp.ge.f32.partialorder %v1586, 0.0
        %vm1651 = vcmp.ge.f32.partialorder %v1587, 0.0
        %vm1652 = vcmp.ge.f32.partialorder %v1588, 0.0
        %vm1653 = vcmp.ge.f32.partialorder %v1589, 0.0
        %vm1654 = vcmp.ge.f32.partialorder %v1590, 0.0
        %vm1655 = vcmp.ge.f32.partialorder %v1591, 0.0
        %vm1656 = vcmp.ge.f32.partialorder %v1592, 0.0
        %vm1657 = vcmp.ge.f32.partialorder %v1593, 0.0
        %vm1658 = vcmp.ge.f32.partialorder %v1594, 0.0
        %vm1659 = vcmp.ge.f32.partialorder %v1595, 0.0
        %vm1660 = vcmp.ge.f32.partialorder %v1596, 0.0
        %vm1661 = vcmp.ge.f32.partialorder %v1597, 0.0
        %vm1662 = vcmp.ge.f32.partialorder %v1598, 0.0
        %vm1663 = vcmp.ge.f32.partialorder %v1599, 0.0
        %vm1664 = vcmp.ge.f32.partialorder %v1600, 0.0
        %vm1665 = vcmp.ge.f32.partialorder %v1601, 0.0
        %vm1666 = vcmp.ge.f32.partialorder %v1602, 0.0
        %vm1667 = vcmp.ge.f32.partialorder %v1603, 0.0
        %vm1668 = vcmp.ge.f32.partialorder %v1604, 0.0
        %vm1669 = vcmp.ge.f32.partialorder %v1605, 0.0
        %vm1670 = vcmp.ge.f32.partialorder %v1606, 0.0
        %vm1671 = vcmp.ge.f32.partialorder %v1607, 0.0
        %vm1672 = vcmp.ge.f32.partialorder %v1608, 0.0
        %vm1673 = vcmp.ge.f32.partialorder %v1609, 0.0
        %vm1674 = vcmp.ge.f32.partialorder %v1610, 0.0
        %vm1675 = vcmp.ge.f32.partialorder %v1611, 0.0
        %vm1676 = vcmp.ge.f32.partialorder %v1612, 0.0
        %vm1677 = vcmp.ge.f32.partialorder %v1613, 0.0
        %vm1678 = vcmp.ge.f32.partialorder %v1614, 0.0
        %vm1679 = vcmp.ge.f32.partialorder %v1615, 0.0
        %vm1680 = vcmp.ge.f32.partialorder %v1616, 0.0
        %vm1681 = vcmp.ge.f32.partialorder %v1617, 0.0
        %vm1682 = vcmp.ge.f32.partialorder %v1618, 0.0
        %vm1683 = vcmp.ge.f32.partialorder %v1619, 0.0
        %v1684 = vld [vmem:[%s339] sm:$0x1]
        %v1686 = vlaneseq
        %v1687 = vshrl.u32 %v1686, 7
        %v1688 = vsub.s32 0, %v1687
        %v1689 = vrot.slane %v1684, %v1688
        %v1691 = vmul.f32 %v1689, %v1556
        %v1692 = vmul.f32 %v1689, %v1557
        %v1693 = vmul.f32 %v1689, %v1558
        %v1694 = vmul.f32 %v1689, %v1559
        %v1695 = vmul.f32 %v1689, %v1560
        %v1696 = vmul.f32 %v1689, %v1561
        %v1697 = vmul.f32 %v1689, %v1562
        %v1698 = vmul.f32 %v1689, %v1563
        %v1699 = vmul.f32 %v1689, %v1564
        %v1700 = vmul.f32 %v1689, %v1565
        %v1701 = vmul.f32 %v1689, %v1566
        %v1702 = vmul.f32 %v1689, %v1567
        %v1703 = vmul.f32 %v1689, %v1568
        %v1704 = vmul.f32 %v1689, %v1569
        %v1705 = vmul.f32 %v1689, %v1570
        %v1706 = vmul.f32 %v1689, %v1571
        %v1707 = vmul.f32 %v1689, %v1572
        %v1708 = vmul.f32 %v1689, %v1573
        %v1709 = vmul.f32 %v1689, %v1574
        %v1710 = vmul.f32 %v1689, %v1575
        %v1711 = vmul.f32 %v1689, %v1576
        %v1712 = vmul.f32 %v1689, %v1577
        %v1713 = vmul.f32 %v1689, %v1578
        %v1714 = vmul.f32 %v1689, %v1579
        %v1715 = vmul.f32 %v1689, %v1580
        %v1716 = vmul.f32 %v1689, %v1581
        %v1717 = vmul.f32 %v1689, %v1582
        %v1718 = vmul.f32 %v1689, %v1583
        %v1719 = vmul.f32 %v1689, %v1584
        %v1720 = vmul.f32 %v1689, %v1585
        %v1721 = vmul.f32 %v1689, %v1586
        %v1722 = vmul.f32 %v1689, %v1587
        %v1723 = vmul.f32 %v1689, %v1588
        %v1724 = vmul.f32 %v1689, %v1589
        %v1725 = vmul.f32 %v1689, %v1590
        %v1726 = vmul.f32 %v1689, %v1591
        %v1727 = vmul.f32 %v1689, %v1592
        %v1728 = vmul.f32 %v1689, %v1593
        %v1729 = vmul.f32 %v1689, %v1594
        %v1730 = vmul.f32 %v1689, %v1595
        %v1731 = vmul.f32 %v1689, %v1596
        %v1732 = vmul.f32 %v1689, %v1597
        %v1733 = vmul.f32 %v1689, %v1598
        %v1734 = vmul.f32 %v1689, %v1599
        %v1735 = vmul.f32 %v1689, %v1600
        %v1736 = vmul.f32 %v1689, %v1601
        %v1737 = vmul.f32 %v1689, %v1602
        %v1738 = vmul.f32 %v1689, %v1603
        %v1739 = vmul.f32 %v1689, %v1604
        %v1740 = vmul.f32 %v1689, %v1605
        %v1741 = vmul.f32 %v1689, %v1606
        %v1742 = vmul.f32 %v1689, %v1607
        %v1743 = vmul.f32 %v1689, %v1608
        %v1744 = vmul.f32 %v1689, %v1609
        %v1745 = vmul.f32 %v1689, %v1610
        %v1746 = vmul.f32 %v1689, %v1611
        %v1747 = vmul.f32 %v1689, %v1612
        %v1748 = vmul.f32 %v1689, %v1613
        %v1749 = vmul.f32 %v1689, %v1614
        %v1750 = vmul.f32 %v1689, %v1615
        %v1751 = vmul.f32 %v1689, %v1616
        %v1752 = vmul.f32 %v1689, %v1617
        %v1753 = vmul.f32 %v1689, %v1618
        %v1754 = vmul.f32 %v1689, %v1619
        %v1755 = vsel %vm1620, %v1556, %v1691
        %v1756 = vsel %vm1621, %v1557, %v1692
        %v1757 = vsel %vm1622, %v1558, %v1693
        %v1758 = vsel %vm1623, %v1559, %v1694
        %v1759 = vsel %vm1624, %v1560, %v1695
        %v1760 = vsel %vm1625, %v1561, %v1696
        %v1761 = vsel %vm1626, %v1562, %v1697
        %v1762 = vsel %vm1627, %v1563, %v1698
        %v1763 = vsel %vm1628, %v1564, %v1699
        %v1764 = vsel %vm1629, %v1565, %v1700
        %v1765 = vsel %vm1630, %v1566, %v1701
        %v1766 = vsel %vm1631, %v1567, %v1702
        %v1767 = vsel %vm1632, %v1568, %v1703
        %v1768 = vsel %vm1633, %v1569, %v1704
        %v1769 = vsel %vm1634, %v1570, %v1705
        %v1770 = vsel %vm1635, %v1571, %v1706
        %v1771 = vsel %vm1636, %v1572, %v1707
        %v1772 = vsel %vm1637, %v1573, %v1708
        %v1773 = vsel %vm1638, %v1574, %v1709
        %v1774 = vsel %vm1639, %v1575, %v1710
        %v1775 = vsel %vm1640, %v1576, %v1711
        %v1776 = vsel %vm1641, %v1577, %v1712
        %v1777 = vsel %vm1642, %v1578, %v1713
        %v1778 = vsel %vm1643, %v1579, %v1714
        %v1779 = vsel %vm1644, %v1580, %v1715
        %v1780 = vsel %vm1645, %v1581, %v1716
        %v1781 = vsel %vm1646, %v1582, %v1717
        %v1782 = vsel %vm1647, %v1583, %v1718
        %v1783 = vsel %vm1648, %v1584, %v1719
        %v1784 = vsel %vm1649, %v1585, %v1720
        %v1785 = vsel %vm1650, %v1586, %v1721
        %v1786 = vsel %vm1651, %v1587, %v1722
        %v1787 = vsel %vm1652, %v1588, %v1723
        %v1788 = vsel %vm1653, %v1589, %v1724
        %v1789 = vsel %vm1654, %v1590, %v1725
        %v1790 = vsel %vm1655, %v1591, %v1726
        %v1791 = vsel %vm1656, %v1592, %v1727
        %v1792 = vsel %vm1657, %v1593, %v1728
        %v1793 = vsel %vm1658, %v1594, %v1729
        %v1794 = vsel %vm1659, %v1595, %v1730
        %v1795 = vsel %vm1660, %v1596, %v1731
        %v1796 = vsel %vm1661, %v1597, %v1732
        %v1797 = vsel %vm1662, %v1598, %v1733
        %v1798 = vsel %vm1663, %v1599, %v1734
        %v1799 = vsel %vm1664, %v1600, %v1735
        %v1800 = vsel %vm1665, %v1601, %v1736
        %v1801 = vsel %vm1666, %v1602, %v1737
        %v1802 = vsel %vm1667, %v1603, %v1738
        %v1803 = vsel %vm1668, %v1604, %v1739
        %v1804 = vsel %vm1669, %v1605, %v1740
        %v1805 = vsel %vm1670, %v1606, %v1741
        %v1806 = vsel %vm1671, %v1607, %v1742
        %v1807 = vsel %vm1672, %v1608, %v1743
        %v1808 = vsel %vm1673, %v1609, %v1744
        %v1809 = vsel %vm1674, %v1610, %v1745
        %v1810 = vsel %vm1675, %v1611, %v1746
        %v1811 = vsel %vm1676, %v1612, %v1747
        %v1812 = vsel %vm1677, %v1613, %v1748
        %v1813 = vsel %vm1678, %v1614, %v1749
        %v1814 = vsel %vm1679, %v1615, %v1750
        %v1815 = vsel %vm1680, %v1616, %v1751
        %v1816 = vsel %vm1681, %v1617, %v1752
        %v1817 = vsel %vm1682, %v1618, %v1753
        %v1818 = vsel %vm1683, %v1619, %v1754
        %v1819 = vpack.c.bf16 %v1756, %v1755
        %v1820 = vpack.c.bf16 %v1758, %v1757
        %v1821 = vpack.c.bf16 %v1760, %v1759
        %v1822 = vpack.c.bf16 %v1762, %v1761
        %v1823 = vpack.c.bf16 %v1764, %v1763
        %v1824 = vpack.c.bf16 %v1766, %v1765
        %v1825 = vpack.c.bf16 %v1768, %v1767
        %v1826 = vpack.c.bf16 %v1770, %v1769
        %v1827 = vpack.c.bf16 %v1772, %v1771
        %v1828 = vpack.c.bf16 %v1774, %v1773
        %v1829 = vpack.c.bf16 %v1776, %v1775
        %v1830 = vpack.c.bf16 %v1778, %v1777
        %v1831 = vpack.c.bf16 %v1780, %v1779
        %v1832 = vpack.c.bf16 %v1782, %v1781
        %v1833 = vpack.c.bf16 %v1784, %v1783
        %v1834 = vpack.c.bf16 %v1786, %v1785
        %v1835 = vpack.c.bf16 %v1788, %v1787
        %v1836 = vpack.c.bf16 %v1790, %v1789
        %v1837 = vpack.c.bf16 %v1792, %v1791
        %v1838 = vpack.c.bf16 %v1794, %v1793
        %v1839 = vpack.c.bf16 %v1796, %v1795
        %v1840 = vpack.c.bf16 %v1798, %v1797
        %v1841 = vpack.c.bf16 %v1800, %v1799
        %v1842 = vpack.c.bf16 %v1802, %v1801
        %v1843 = vpack.c.bf16 %v1804, %v1803
        %v1844 = vpack.c.bf16 %v1806, %v1805
        %v1845 = vpack.c.bf16 %v1808, %v1807
        %v1846 = vpack.c.bf16 %v1810, %v1809
        %v1847 = vpack.c.bf16 %v1812, %v1811
        %v1848 = vpack.c.bf16 %v1814, %v1813
        %v1849 = vpack.c.bf16 %v1816, %v1815
        %v1850 = vpack.c.bf16 %v1818, %v1817
        %v1883 = vunpack.c.l.b16 %v1819
        %v1884 = vunpack.c.h.b16 %v1819
        %v1885 = vunpack.c.l.b16 %v1820
        %v1886 = vunpack.c.h.b16 %v1820
        %v1887 = vunpack.c.l.b16 %v1821
        %v1888 = vunpack.c.h.b16 %v1821
        %v1889 = vunpack.c.l.b16 %v1822
        %v1890 = vunpack.c.h.b16 %v1822
        %v1891 = vunpack.c.l.b16 %v1823
        %v1892 = vunpack.c.h.b16 %v1823
        %v1893 = vunpack.c.l.b16 %v1824
        %v1894 = vunpack.c.h.b16 %v1824
        %v1895 = vunpack.c.l.b16 %v1825
        %v1896 = vunpack.c.h.b16 %v1825
        %v1897 = vunpack.c.l.b16 %v1826
        %v1898 = vunpack.c.h.b16 %v1826
        %v1899 = vunpack.c.l.b16 %v1827
        %v1900 = vunpack.c.h.b16 %v1827
        %v1901 = vunpack.c.l.b16 %v1828
        %v1902 = vunpack.c.h.b16 %v1828
        %v1903 = vunpack.c.l.b16 %v1829
        %v1904 = vunpack.c.h.b16 %v1829
        %v1905 = vunpack.c.l.b16 %v1830
        %v1906 = vunpack.c.h.b16 %v1830
        %v1907 = vunpack.c.l.b16 %v1831
        %v1908 = vunpack.c.h.b16 %v1831
        %v1909 = vunpack.c.l.b16 %v1832
        %v1910 = vunpack.c.h.b16 %v1832
        %v1911 = vunpack.c.l.b16 %v1833
        %v1912 = vunpack.c.h.b16 %v1833
        %v1913 = vunpack.c.l.b16 %v1834
        %v1914 = vunpack.c.h.b16 %v1834
        %v1915 = vunpack.c.l.b16 %v1835
        %v1916 = vunpack.c.h.b16 %v1835
        %v1917 = vunpack.c.l.b16 %v1836
        %v1918 = vunpack.c.h.b16 %v1836
        %v1919 = vunpack.c.l.b16 %v1837
        %v1920 = vunpack.c.h.b16 %v1837
        %v1921 = vunpack.c.l.b16 %v1838
        %v1922 = vunpack.c.h.b16 %v1838
        %v1923 = vunpack.c.l.b16 %v1839
        %v1924 = vunpack.c.h.b16 %v1839
        %v1925 = vunpack.c.l.b16 %v1840
        %v1926 = vunpack.c.h.b16 %v1840
        %v1927 = vunpack.c.l.b16 %v1841
        %v1928 = vunpack.c.h.b16 %v1841
        %v1929 = vunpack.c.l.b16 %v1842
        %v1930 = vunpack.c.h.b16 %v1842
        %v1931 = vunpack.c.l.b16 %v1843
        %v1932 = vunpack.c.h.b16 %v1843
        %v1933 = vunpack.c.l.b16 %v1844
        %v1934 = vunpack.c.h.b16 %v1844
        %v1935 = vunpack.c.l.b16 %v1845
        %v1936 = vunpack.c.h.b16 %v1845
        %v1937 = vunpack.c.l.b16 %v1846
        %v1938 = vunpack.c.h.b16 %v1846
        %v1939 = vunpack.c.l.b16 %v1847
        %v1940 = vunpack.c.h.b16 %v1847
        %v1941 = vunpack.c.l.b16 %v1848
        %v1942 = vunpack.c.h.b16 %v1848
        %v1943 = vunpack.c.l.b16 %v1849
        %v1944 = vunpack.c.h.b16 %v1849
        %v1945 = vunpack.c.l.b16 %v1850
        %v1946 = vunpack.c.h.b16 %v1850
        %v1947 = vpack.c.b16 %v1883, %v1883
        %v1948 = vpack.c.b16 %v1884, %v1884
        %v1949 = vpack.c.b16 %v1885, %v1885
        %v1950 = vpack.c.b16 %v1886, %v1886
        %v1951 = vpack.c.b16 %v1887, %v1887
        %v1952 = vpack.c.b16 %v1888, %v1888
        %v1953 = vpack.c.b16 %v1889, %v1889
        %v1954 = vpack.c.b16 %v1890, %v1890
        %v1955 = vpack.c.b16 %v1891, %v1891
        %v1956 = vpack.c.b16 %v1892, %v1892
        %v1957 = vpack.c.b16 %v1893, %v1893
        %v1958 = vpack.c.b16 %v1894, %v1894
        %v1959 = vpack.c.b16 %v1895, %v1895
        %v1960 = vpack.c.b16 %v1896, %v1896
        %v1961 = vpack.c.b16 %v1897, %v1897
        %v1962 = vpack.c.b16 %v1898, %v1898
        %v1963 = vpack.c.b16 %v1899, %v1899
        %v1964 = vpack.c.b16 %v1900, %v1900
        %v1965 = vpack.c.b16 %v1901, %v1901
        %v1966 = vpack.c.b16 %v1902, %v1902
        %v1967 = vpack.c.b16 %v1903, %v1903
        %v1968 = vpack.c.b16 %v1904, %v1904
        %v1969 = vpack.c.b16 %v1905, %v1905
        %v1970 = vpack.c.b16 %v1906, %v1906
        %v1971 = vpack.c.b16 %v1907, %v1907
        %v1972 = vpack.c.b16 %v1908, %v1908
        %v1973 = vpack.c.b16 %v1909, %v1909
        %v1974 = vpack.c.b16 %v1910, %v1910
        %v1975 = vpack.c.b16 %v1911, %v1911
        %v1976 = vpack.c.b16 %v1912, %v1912
        %v1977 = vpack.c.b16 %v1913, %v1913
        %v1978 = vpack.c.b16 %v1914, %v1914
        %v1979 = vpack.c.b16 %v1915, %v1915
        %v1980 = vpack.c.b16 %v1916, %v1916
        %v1981 = vpack.c.b16 %v1917, %v1917
        %v1982 = vpack.c.b16 %v1918, %v1918
        %v1983 = vpack.c.b16 %v1919, %v1919
        %v1984 = vpack.c.b16 %v1920, %v1920
        %v1985 = vpack.c.b16 %v1921, %v1921
        %v1986 = vpack.c.b16 %v1922, %v1922
        %v1987 = vpack.c.b16 %v1923, %v1923
        %v1988 = vpack.c.b16 %v1924, %v1924
        %v1989 = vpack.c.b16 %v1925, %v1925
        %v1990 = vpack.c.b16 %v1926, %v1926
        %v1991 = vpack.c.b16 %v1927, %v1927
        %v1992 = vpack.c.b16 %v1928, %v1928
        %v1993 = vpack.c.b16 %v1929, %v1929
        %v1994 = vpack.c.b16 %v1930, %v1930
        %v1995 = vpack.c.b16 %v1931, %v1931
        %v1996 = vpack.c.b16 %v1932, %v1932
        %v1997 = vpack.c.b16 %v1933, %v1933
        %v1998 = vpack.c.b16 %v1934, %v1934
        %v1999 = vpack.c.b16 %v1935, %v1935
        %v2000 = vpack.c.b16 %v1936, %v1936
        %v2001 = vpack.c.b16 %v1937, %v1937
        %v2002 = vpack.c.b16 %v1938, %v1938
        %v2003 = vpack.c.b16 %v1939, %v1939
        %v2004 = vpack.c.b16 %v1940, %v1940
        %v2005 = vpack.c.b16 %v1941, %v1941
        %v2006 = vpack.c.b16 %v1942, %v1942
        %v2007 = vpack.c.b16 %v1943, %v1943
        %v2008 = vpack.c.b16 %v1944, %v1944
        %v2009 = vpack.c.b16 %v1945, %v1945
        %v2010 = vpack.c.b16 %v1946, %v1946
        %2075 = vst [vmem:[%s347] sm:$0xf] %v1947
        %2076 = vst [vmem:[%s347 + $0x4] sm:$0xf] %v1948
        %2077 = vst [vmem:[%s347 + $0x8] sm:$0xf] %v1949
        %2078 = vst [vmem:[%s347 + $0xc] sm:$0xf] %v1950
        %2079 = vst [vmem:[%s347 + $0x10] sm:$0xf] %v1951
        %2080 = vst [vmem:[%s347 + $0x14] sm:$0xf] %v1952
        %2081 = vst [vmem:[%s347 + $0x18] sm:$0xf] %v1953
        %2082 = vst [vmem:[%s347 + $0x1c] sm:$0xf] %v1954
        %2083 = vst [vmem:[%s347 + $0x20] sm:$0xf] %v1955
        %2084 = vst [vmem:[%s347 + $0x24] sm:$0xf] %v1956
        %2085 = vst [vmem:[%s347 + $0x28] sm:$0xf] %v1957
        %2086 = vst [vmem:[%s347 + $0x2c] sm:$0xf] %v1958
        %2087 = vst [vmem:[%s347 + $0x30] sm:$0xf] %v1959
        %2088 = vst [vmem:[%s347 + $0x34] sm:$0xf] %v1960
        %2089 = vst [vmem:[%s347 + $0x38] sm:$0xf] %v1961
        %2090 = vst [vmem:[%s347 + $0x3c] sm:$0xf] %v1962
        %2091 = vst [vmem:[%s347 + $0x40] sm:$0xf] %v1963
        %2092 = vst [vmem:[%s347 + $0x44] sm:$0xf] %v1964
        %2093 = vst [vmem:[%s347 + $0x48] sm:$0xf] %v1965
        %2094 = vst [vmem:[%s347 + $0x4c] sm:$0xf] %v1966
        %2095 = vst [vmem:[%s347 + $0x50] sm:$0xf] %v1967
        %2096 = vst [vmem:[%s347 + $0x54] sm:$0xf] %v1968
        %2097 = vst [vmem:[%s347 + $0x58] sm:$0xf] %v1969
        %2098 = vst [vmem:[%s347 + $0x5c] sm:$0xf] %v1970
        %2099 = vst [vmem:[%s347 + $0x60] sm:$0xf] %v1971
        %2100 = vst [vmem:[%s347 + $0x64] sm:$0xf] %v1972
        %2101 = vst [vmem:[%s347 + $0x68] sm:$0xf] %v1973
        %2102 = vst [vmem:[%s347 + $0x6c] sm:$0xf] %v1974
        %2103 = vst [vmem:[%s347 + $0x70] sm:$0xf] %v1975
        %2104 = vst [vmem:[%s347 + $0x74] sm:$0xf] %v1976
        %2105 = vst [vmem:[%s347 + $0x78] sm:$0xf] %v1977
        %2106 = vst [vmem:[%s347 + $0x7c] sm:$0xf] %v1978
        %2107 = vst [vmem:[%s347 + $0x80] sm:$0xf] %v1979
        %2108 = vst [vmem:[%s347 + $0x84] sm:$0xf] %v1980
        %2109 = vst [vmem:[%s347 + $0x88] sm:$0xf] %v1981
        %2110 = vst [vmem:[%s347 + $0x8c] sm:$0xf] %v1982
        %2111 = vst [vmem:[%s347 + $0x90] sm:$0xf] %v1983
        %2112 = vst [vmem:[%s347 + $0x94] sm:$0xf] %v1984
        %2113 = vst [vmem:[%s347 + $0x98] sm:$0xf] %v1985
        %2114 = vst [vmem:[%s347 + $0x9c] sm:$0xf] %v1986
        %2115 = vst [vmem:[%s347 + $0xa0] sm:$0xf] %v1987
        %2116 = vst [vmem:[%s347 + $0xa4] sm:$0xf] %v1988
        %2117 = vst [vmem:[%s347 + $0xa8] sm:$0xf] %v1989
        %2118 = vst [vmem:[%s347 + $0xac] sm:$0xf] %v1990
        %2119 = vst [vmem:[%s347 + $0xb0] sm:$0xf] %v1991
        %2120 = vst [vmem:[%s347 + $0xb4] sm:$0xf] %v1992
        %2121 = vst [vmem:[%s347 + $0xb8] sm:$0xf] %v1993
        %2122 = vst [vmem:[%s347 + $0xbc] sm:$0xf] %v1994
        %2123 = vst [vmem:[%s347 + $0xc0] sm:$0xf] %v1995
        %2124 = vst [vmem:[%s347 + $0xc4] sm:$0xf] %v1996
        %2125 = vst [vmem:[%s347 + $0xc8] sm:$0xf] %v1997
        %2126 = vst [vmem:[%s347 + $0xcc] sm:$0xf] %v1998
        %2127 = vst [vmem:[%s347 + $0xd0] sm:$0xf] %v1999
        %2128 = vst [vmem:[%s347 + $0xd4] sm:$0xf] %v2000
        %2129 = vst [vmem:[%s347 + $0xd8] sm:$0xf] %v2001
        %2130 = vst [vmem:[%s347 + $0xdc] sm:$0xf] %v2002
        %2131 = vst [vmem:[%s347 + $0xe0] sm:$0xf] %v2003
        %2132 = vst [vmem:[%s347 + $0xe4] sm:$0xf] %v2004
        %2133 = vst [vmem:[%s347 + $0xe8] sm:$0xf] %v2005
        %2134 = vst [vmem:[%s347 + $0xec] sm:$0xf] %v2006
        %2135 = vst [vmem:[%s347 + $0xf0] sm:$0xf] %v2007
        %2136 = vst [vmem:[%s347 + $0xf4] sm:$0xf] %v2008
        %2137 = vst [vmem:[%s347 + $0xf8] sm:$0xf] %v2009
        %2138 = vst [vmem:[%s347 + $0xfc] sm:$0xf] %v2010
      $region48: #{pallas_matmul_fused.1} parent=39 // pred_fallthru
        _
      %s2139 = smul.u32 64, %s21
      %p2140 = scmp.lt.s32.totalorder %s2139, 255
      %s2141 = scalar_select %p2140, %s2139, 255
      %p2142 = scmp.lt.s32.totalorder %s22, 0
      %s2143 = scalar_select %p2142, %s22, 0
      %s2144 = sadd.s32 %s2143, %s2141
      %s2145 = smul.addr %s2144, 4
      %s2146 = scalar_lea.vmem %s5, %s2145
      // Predicated region
      $region49: #{pallas_matmul_fused.1} parent=39 // pred_check
        %p2147 = pneg %p189
      $region50: #{pallas_matmul_fused.1} parent=39 // pred_check_branch
        %2149 = sbr.rel (%p2147) target = $region52
      $region51: #{pallas_matmul_fused.1} parent=39 // pred_region
        %s2150 = smul.u32 64, %s21
      $region52: #{pallas_matmul_fused.1} parent=39 // pred_fallthru
        _
    $region40: #{pallas_matmul_fused.1} parent=5 // pred_fallthru
      _
    %p2151 = scmp.le.s32.totalorder 2, %s11
    // Predicated region
    $region53: #{pallas_matmul_fused.1} parent=5 // pred_check
      %p2152 = pneg %p2151
    $region54: #{pallas_matmul_fused.1} parent=5 // pred_check_branch
      %2154 = sbr.rel (%p2152) target = $region56
    $region55: #{pallas_matmul_fused.1} parent=5 // pred_region
      %s2155 = ssub.s32 %s11, 2
      // Predicated region
      $region57: #{pallas_matmul_fused.1} parent=55 // pred_check
        %p2156 = pneg %p195
      $region58: #{pallas_matmul_fused.1} parent=55 // pred_check_branch
        %2158 = sbr.rel (%p2156) target = $region60
      $region59: #{pallas_matmul_fused.1} parent=55 // pred_region
        %s2159 = smul.u32 64, %s24
        %p2160 = scmp.lt.s32.totalorder %s2159, 255
        %s2161 = scalar_select %p2160, %s2159, 255
        %p2162 = scmp.lt.s32.totalorder %s25, 0
        %s2163 = scalar_select %p2162, %s25, 0
        %s2164 = sadd.s32 %s2163, %s2161
        %s2165 = smul.addr %s2164, 4
        %s2166 = scalar_lea.vmem %s5, %s2165
      $region60: #{pallas_matmul_fused.1} parent=55 // pred_fallthru
        _
    $region56: #{pallas_matmul_fused.1} parent=5 // pred_fallthru
      _
  $region6: #{pallas_matmul_fused.1} parent=0 // loop_footer
    %s15 = sadd.s32 1, %s11
  $region7: #{pallas_matmul_fused.1} parent=0 // loop_footer_branch
    %10 = sbr.rel target = $region3
  $region8: #{pallas_matmul_fused.1} parent=0 // loop_exit
    _

</llo_original>
